<compile_context>
chip_gen: v6e
topology: v6e:2x2x1
jax: 0.10.0
libtpu: 0.0.40
codegen_flags: <defaults>
</compile_context>

<pallas_src>
import functools

import jax
import jax.numpy as jnp
from jax.experimental import pallas as pl
from jax.experimental.pallas import tpu as pltpu

EPS = 1e-5


def _vmem_limit_bytes():
    """~75% of physical VMEM, capped at 100 MiB (=> ~96 MiB v5e/v6e, ~48 MiB v7x)."""
    try:
        cap = int(pltpu.get_tpu_info().vmem_capacity_bytes)
    except Exception:
        cap = 64 * 1024 * 1024          # conservative fallback (v7x-sized)
    return min(cap * 3 // 4, 100 * 1024 * 1024)


def _pick_batch_tile(batch, per_sample_bytes, vmem_budget, target_bytes=4 << 20):
    """Samples per grid step: large enough to amortize the ~0.35us per-step overhead
    and tiny-DMA latency, small enough that double-buffered blocks stay well inside
    the scoped-VMEM budget, and leaving >= 2 grid steps when batch > 1 so the
    'parallel' axis still shards across v7x's 2 TensorCores."""
    bb = max(1, min(batch, target_bytes // max(1, per_sample_bytes)))
    if batch > 1:
        bb = min(bb, (batch + 1) // 2)
    while bb > 1 and 4 * bb * per_sample_bytes > vmem_budget:
        bb -= 1
    return bb


def _main_branch_kernel(xph_ref, w1_ref, b1_ref, lab_ref, out_ref,
                        *, K, stride, c_out, mxu_dtype):
    """Branch 1 for a tile of bb samples: strided Conv1d as K accumulated batched MXU
    matmuls + InstanceNorm + ReLU, then on-chip channel concat with the label branch.

    xph_ref : (bb, stride, Cin, M)   phase-split zero-padded x (phase r = x_pad[:, r::s])
    w1_ref  : (K, Cout, Cin)
    b1_ref  : (Cout, 1)
    lab_ref : (bb, Cmid, L1)         precomputed label-branch activations
    out_ref : (bb, Cout+Cmid, L1)    lane-dense NCL output block
    """
    bb = out_ref.shape[0]
    l1 = out_ref.shape[2]
    cin = xph_ref.shape[2]

    # One hoisted broadcast of the weights over the batch tile (JAX doesn't CSE
    # broadcast_in_dim, so don't broadcast inside the tap loop).
    w_b = jnp.broadcast_to(w1_ref[...][None], (bb, K, c_out, cin))

    # No im2col scratch: K accumulated batched matmuls on phase-shifted slabs.
    acc = jnp.zeros((bb, c_out, l1), jnp.float32)
    for k in range(K):
        q, r = divmod(k, stride)
        slab = xph_ref[:, r, :, q:q + l1]                       # (bb, Cin, L1)
        acc = acc + jnp.einsum('boc,bcl->bol', w_b[:, k], slab,
                               preferred_element_type=jnp.float32)
    y = acc + b1_ref[...][None]          # bias (cancels under InstanceNorm; kept for clarity)

    # InstanceNorm1d: per-(sample, channel) stats over L, one pass, rsqrt on EUP.
    inv_n = 1.0 / l1
    mu = jnp.sum(y, axis=2, keepdims=True) * inv_n
    var = jnp.maximum(jnp.sum(y * y, axis=2, keepdims=True) * inv_n - mu * mu, 0.0)
    y = jnp.maximum((y - mu) * jax.lax.rsqrt(var + EPS), 0.0)

    # Channel concat in NCL: both stores are lane-dense over L1.
    out_ref[:, :c_out, :] = y.astype(out_ref.dtype)
    out_ref[:, c_out:, :] = lab_ref[...]


def _label_branch_kernel(dpad_ref, w2a_ref, b2a_ref, g2a_ref, bt2a_ref,
                         w2b_ref, b2b_ref, g2b_ref, bt2b_ref,
                         lab_ref, hpad_ref,
                         *, K, p_lbl, L2a, L1, mxu_dtype):
    """Label branch, whole batch at once (BatchNorm needs full (B, L) statistics).

    dpad_ref : (B, Lp)            padded embedding rows (Cin = 1)
    w2a_ref  : (K, Cmid, 1)       conv #1 weights (per-tap)
    w2b_ref  : (K, Cmid, Cmid)    conv #2 weights (per-tap, [k, out, in])
    b*/g*/bt*: (Cmid, 1)          biases / BN gamma / BN beta
    lab_ref  : (B, Cmid, L1)      output
    hpad_ref : VMEM (B, Cmid, Lp2) conv#1 activations with zero pad fringes for conv #2
    """
    B = dpad_ref.shape[0]
    Cmid = lab_ref.shape[1]

    # ---- conv #1 (Cin == 1): batched VPU broadcast-FMA over the whole (B, Cmid, L2a) slab.
    d = dpad_ref[...]                                           # (B, Lp)
    w2a = w2a_ref[...]                                          # (K, Cmid, 1)
    acc1 = jnp.zeros((B, Cmid, L2a), jnp.float32)
    for k in range(K):
        acc1 = acc1 + w2a[k][None] * d[:, None, k:k + L2a]
    acc1 = acc1 + b2a_ref[...][None]

    # ---- BatchNorm #1 (training stats over (B, L)) + ReLU, one pass, clamped variance.
    inv_n1 = 1.0 / (B * L2a)
    s1 = jnp.sum(jnp.sum(acc1, axis=2, keepdims=True), axis=0, keepdims=True)
    q1 = jnp.sum(jnp.sum(acc1 * acc1, axis=2, keepdims=True), axis=0, keepdims=True)
    m1 = s1 * inv_n1
    v1 = jnp.maximum(q1 * inv_n1 - m1 * m1, 0.0)
    sc1 = jax.lax.rsqrt(v1 + EPS) * g2a_ref[...][None]
    sh1 = bt2a_ref[...][None] - m1 * sc1
    h1 = jnp.maximum(acc1 * sc1 + sh1, 0.0)                     # (B, Cmid, L2a)

    # ---- zero-pad along L for conv #2 (only the fringes are memset, not the whole slab).
    if p_lbl > 0:
        hpad_ref[:, :, :p_lbl] = jnp.zeros((B, Cmid, p_lbl), jnp.float32)
        hpad_ref[:, :, p_lbl + L2a:] = jnp.zeros((B, Cmid, p_lbl), jnp.float32)
    hpad_ref[:, :, p_lbl:p_lbl + L2a] = h1
    hp = hpad_ref[...].astype(mxu_dtype)                        # (B, Cmid, Lp2)

    # ---- conv #2: K accumulated batched MXU matmuls (no K*Cmid*B*L1 im2col scratch).
    w2b = w2b_ref[...].astype(mxu_dtype)                        # (K, Cmid, Cmid)
    w2b_b = jnp.broadcast_to(w2b[None], (B, K, Cmid, Cmid))
    acc2 = jnp.zeros((B, Cmid, L1), jnp.float32)
    for k in range(K):
        acc2 = acc2 + jnp.einsum('boc,bcl->bol', w2b_b[:, k], hp[:, :, k:k + L1],
                                 preferred_element_type=jnp.float32)
    acc2 = acc2 + b2b_ref[...][None]

    # ---- BatchNorm #2 + ReLU.
    inv_n2 = 1.0 / (B * L1)
    s2 = jnp.sum(jnp.sum(acc2, axis=2, keepdims=True), axis=0, keepdims=True)
    q2 = jnp.sum(jnp.sum(acc2 * acc2, axis=2, keepdims=True), axis=0, keepdims=True)
    m2 = s2 * inv_n2
    v2 = jnp.maximum(q2 * inv_n2 - m2 * m2, 0.0)
    sc2 = jax.lax.rsqrt(v2 + EPS) * g2b_ref[...][None]
    sh2 = bt2b_ref[...][None] - m2 * sc2
    lab_ref[...] = jnp.maximum(acc2 * sc2 + sh2, 0.0)


def dis_conv_label_emb_forward(params, x, dist, *, kernel_size, stride, padding,
                               mxu_dtype=jnp.float32):
    """x: (B, Cin, L) float32 (NCL, like PyTorch); dist: (B, 1) int32 in [0, 12).
    Returns (B, Cout + Cout//2, L1) float32 in NCL (matches PyTorch).
    mxu_dtype=jnp.bfloat16 uses bf16 MXU inputs with f32 accumulation (small numeric
    deviation vs the f32 reference)."""
    B, Cin, L = x.shape
    K = kernel_size
    s = stride
    w1 = params["w1"]                              # (Cout, Cin, K)
    Cout = w1.shape[0]
    Cmid = params["w2a"].shape[0]                  # output_dim // 2
    linear_len = params["emb"].shape[1]
    p_lbl = K // 2 - 1

    vmem_limit = _vmem_limit_bytes()

    # ---- branch-1 glue: single fused pad + phase split (one extra HBM pass for x) ----
    L_pad = L + 2 * padding
    L1 = (L_pad - K) // s + 1
    M = -(-L_pad // s)                             # ceil(L_pad / s)
    x_ph = jnp.pad(x, ((0, 0), (0, 0), (padding, padding + (M * s - L_pad))))
    x_ph = jnp.transpose(x_ph.reshape(B, Cin, M, s), (0, 3, 1, 2))  # (B, s, Cin, M)
    x_ph = x_ph.astype(mxu_dtype)                  # bf16 path halves x DMA/HBM bytes

    w1k = jnp.transpose(w1, (2, 0, 1)).astype(mxu_dtype)            # (K, Cout, Cin)
    b1c = params["b1"][:, None]

    # ---- branch-2 glue: embedding gather (12-row table) + zero pad ----
    d = params["emb"][dist[:, 0]]                  # (B, linear_len)  (XLA gather)
    d_pad = jnp.pad(d, ((0, 0), (p_lbl, p_lbl)))   # (B, Lp)
    Lp = linear_len + 2 * p_lbl
    L2a = Lp - K + 1
    Lp2 = L2a + 2 * p_lbl
    L1b = Lp2 - K + 1
    assert L1b == L1, (L1b, L1)                    # required for the channel concat

    w2ak = jnp.transpose(params["w2a"], (2, 0, 1))                  # (K, Cmid, 1)
    w2bk = jnp.transpose(params["w2b"], (2, 0, 1))                  # (K, Cmid, Cmid)

    # --- label branch: small gridless call (BatchNorm needs full-batch stats) ---
    label = pl.pallas_call(
        functools.partial(_label_branch_kernel, K=K, p_lbl=p_lbl, L2a=L2a, L1=L1,
                          mxu_dtype=mxu_dtype),
        out_shape=jax.ShapeDtypeStruct((B, Cmid, L1), jnp.float32),
        in_specs=[pl.BlockSpec(memory_space=pltpu.MemorySpace.VMEM)] * 9,
        out_specs=pl.BlockSpec(memory_space=pltpu.MemorySpace.VMEM),
        scratch_shapes=[pltpu.VMEM((B, Cmid, Lp2), jnp.float32)],
        compiler_params=pltpu.CompilerParams(vmem_limit_bytes=vmem_limit),
    )(d_pad, w2ak,
      params["b2a"][:, None], params["g2a"][:, None], params["bt2a"][:, None],
      w2bk,
      params["b2b"][:, None], params["g2b"][:, None], params["bt2b"][:, None])

    # --- main branch: batch-tiled parallel grid, lane-dense NCL output, on-chip concat ---
    itemsize = jnp.dtype(mxu_dtype).itemsize
    per_sample_bytes = (s * Cin * M * itemsize
                        + (Cmid * L1 + (Cout + Cmid) * L1) * 4)
    bb = _pick_batch_tile(B, per_sample_bytes, vmem_limit)
    B_pad = -(-B // bb) * bb
    if B_pad != B:                                 # pad batch so blocks tile evenly
        x_ph = jnp.pad(x_ph, ((0, B_pad - B), (0, 0), (0, 0), (0, 0)))
        label = jnp.pad(label, ((0, B_pad - B), (0, 0), (0, 0)))

    # TODO(synk): for very long L1 also tile L1 (second grid axis) with two-pass
    #             InstanceNorm statistics so per-step blocks stay inside VMEM.
    # TODO(synk): when L1 is large but not a multiple of 128, pad L1 up to the next
    #             multiple of 128 in the working block for unmasked full-lane stores.
    out = pl.pallas_call(
        functools.partial(_main_branch_kernel, K=K, stride=s, c_out=Cout,
                          mxu_dtype=mxu_dtype),
        out_shape=jax.ShapeDtypeStruct((B_pad, Cout + Cmid, L1), jnp.float32),
        grid=(B_pad // bb,),
        in_specs=[
            pl.BlockSpec((bb, s, Cin, M), lambda i: (i, 0, 0, 0)),
            pl.BlockSpec((K, Cout, Cin), lambda i: (0, 0, 0)),
            pl.BlockSpec((Cout, 1), lambda i: (0, 0)),
            pl.BlockSpec((bb, Cmid, L1), lambda i: (i, 0, 0)),
        ],
        out_specs=pl.BlockSpec((bb, Cout + Cmid, L1), lambda i: (i, 0, 0)),
        compiler_params=pltpu.CompilerParams(
            dimension_semantics=("parallel",),      # megacore sharding on v7x
            vmem_limit_bytes=vmem_limit,            # ~96 MiB v5e/v6e, ~48 MiB v7x
        ),
    )(x_ph, w1k, b1c, label)
    return out[:B] if B_pad != B else out


def _ref_forward(params, x, dist, *, kernel_size, stride, padding):
    """Pure-JAX reference mirroring the PyTorch forward (for verification)."""
    def conv1d(x, w, b, s, p):
        y = jax.lax.conv_general_dilated(
            x, w, window_strides=(s,), padding=[(p, p)],
            dimension_numbers=("NCH", "OIH", "NCH"))
        return y + b[None, :, None]

    def inorm(y):
        mu = jnp.mean(y, axis=2, keepdims=True)
        var = jnp.mean(jnp.square(y - mu), axis=2, keepdims=True)
        return (y - mu) * jax.lax.rsqrt(var + EPS)

    def bnorm(y, g, bt):
        mu = jnp.mean(y, axis=(0, 2), keepdims=True)
        var = jnp.mean(jnp.square(y - mu), axis=(0, 2), keepdims=True)
        return (y - mu) * jax.lax.rsqrt(var + EPS) * g[None, :, None] + bt[None, :, None]

    K = kernel_size
    p_lbl = K // 2 - 1
    x1 = jax.nn.relu(inorm(conv1d(x, params["w1"], params["b1"], stride, padding)))
    d = params["emb"][dist[:, 0]][:, None, :]          # (B, 1, linear_len)
    h = jax.nn.relu(bnorm(conv1d(d, params["w2a"], params["b2a"], 1, p_lbl),
                          params["g2a"], params["bt2a"]))
    h2 = jax.nn.relu(bnorm(conv1d(h, params["w2b"], params["b2b"], 1, p_lbl),
                           params["g2b"], params["bt2b"]))
    return jnp.concatenate([x1, h2], axis=1)


if __name__ == "__main__":
    key = jax.random.PRNGKey(0)
    ks = jax.random.split(key, 9)

    # small shapes consistent with the module
    B, Cin, L = 2, 4, 16
    Cout, linear_len, K, stride, padding = 8, 10, 4, 2, 1
    Cmid = Cout // 2
    # branch-1 output length == branch-2 output length == 8, so concat is valid.

    params = dict(
        w1=0.1 * jax.random.normal(ks[0], (Cout, Cin, K), jnp.float32),
        b1=0.1 * jax.random.normal(ks[1], (Cout,), jnp.float32),
        emb=jax.random.normal(ks[2], (12, linear_len), jnp.float32),
        w2a=0.1 * jax.random.normal(ks[3], (Cmid, 1, K), jnp.float32),
        b2a=0.1 * jax.random.normal(ks[4], (Cmid,), jnp.float32),
        g2a=jnp.ones((Cmid,), jnp.float32),     # BatchNorm default init
        bt2a=jnp.zeros((Cmid,), jnp.float32),
        w2b=0.1 * jax.random.normal(ks[5], (Cmid, Cmid, K), jnp.float32),
        b2b=0.1 * jax.random.normal(ks[6], (Cmid,), jnp.float32),
        g2b=jnp.ones((Cmid,), jnp.float32),
        bt2b=jnp.zeros((Cmid,), jnp.float32),
    )

    x = jax.random.normal(ks[7], (B, Cin, L), jnp.float32)
    dist = jax.random.randint(ks[8], (B, 1), 0, 12, dtype=jnp.int32)

    ref = _ref_forward(params, x, dist, kernel_size=K, stride=stride, padding=padding)
    L1 = (L + 2 * padding - K) // stride + 1

    # f32 MXU-input path: must match the reference tightly.
    fwd = jax.jit(functools.partial(dis_conv_label_emb_forward,
                                    kernel_size=K, stride=stride, padding=padding))
    out = jax.block_until_ready(fwd(params, x, dist))
    assert out.shape == (B, Cout + Cmid, L1), out.shape
    assert jnp.allclose(out, ref, atol=2e-4, rtol=2e-4), float(jnp.max(jnp.abs(out - ref)))

    # bf16 MXU-input path (f32 accumulation): looser tolerance vs the f32 reference.
    fwd_bf16 = jax.jit(functools.partial(dis_conv_label_emb_forward,
                                         kernel_size=K, stride=stride, padding=padding,
                                         mxu_dtype=jnp.bfloat16))
    out_bf16 = jax.block_until_ready(fwd_bf16(params, x, dist))
    assert out_bf16.shape == out.shape
    assert bool(jnp.all(jnp.isfinite(out_bf16)))
    assert jnp.allclose(out_bf16, ref, atol=1e-1, rtol=1e-1), \
        float(jnp.max(jnp.abs(out_bf16 - ref)))

    print("KERNEL_OK")
</pallas_src>

<mosaic_0001>
module attributes {stable_mosaic.version = 11 : i64} {
  func.func @_main_branch_kernel(%arg0: i32, %arg1: memref<1x2x4x9xf32, #tpu.memory_space<vmem>>, %arg2: memref<4x8x4xf32, #tpu.memory_space<vmem>>, %arg3: memref<8x1xf32, #tpu.memory_space<vmem>>, %arg4: memref<1x4x8xf32, #tpu.memory_space<vmem>>, %arg5: memref<1x12x8xf32, #tpu.memory_space<vmem>>) attributes {dimension_semantics = [#tpu.dimension_semantics<parallel>], iteration_bounds = array<i64: 2>, scalar_prefetch = 0 : i64, scratch_operands = 0 : i64, tpu.core_type = #tpu.core_type<tc>, window_params = [{transform_indices = @transform_0, window_bounds = array<i64: 1, 2, 4, 9>}, {pipeline_mode = #tpu.pipeline_mode<synchronous>, transform_indices = @transform_1, window_bounds = array<i64: 4, 8, 4>}, {pipeline_mode = #tpu.pipeline_mode<synchronous>, transform_indices = @transform_2, window_bounds = array<i64: 8, 1>}, {transform_indices = @transform_3, window_bounds = array<i64: 1, 4, 8>}, {transform_indices = @transform_4, window_bounds = array<i64: 1, 12, 8>}]} {
    %c0 = arith.constant 0 : index
    %c0_0 = arith.constant 0 : index
    %c0_1 = arith.constant 0 : index
    %0 = vector.load %arg2[%c0, %c0_0, %c0_1] : memref<4x8x4xf32, #tpu.memory_space<vmem>>, vector<4x8x4xf32>
    %1 = vector.shape_cast %0 : vector<4x8x4xf32> to vector<1x4x8x4xf32>
    %cst = arith.constant 0.000000e+00 : f32
    %2 = vector.broadcast %cst : f32 to vector<1x8x8xf32>
    %c0_2 = arith.constant 0 : index
    %c0_3 = arith.constant 0 : index
    %c0_4 = arith.constant 0 : index
    %c0_5 = arith.constant 0 : index
    %3 = vector.load %arg1[%c0_2, %c0_3, %c0_4, %c0_5] : memref<1x2x4x9xf32, #tpu.memory_space<vmem>>, vector<1x1x4x8xf32>
    %4 = vector.shape_cast %3 : vector<1x1x4x8xf32> to vector<1x4x8xf32>
    %5 = vector.extract_strided_slice %1 {offsets = [0, 0, 0, 0], sizes = [1, 1, 8, 4], strides = [1, 1, 1, 1]} : vector<1x4x8x4xf32> to vector<1x1x8x4xf32>
    %6 = vector.shape_cast %5 : vector<1x1x8x4xf32> to vector<1x8x4xf32>
    "tpu.trace_start"() <{level = 10 : i32, message = "boc,bcl->bol"}> : () -> ()
    %cst_6 = arith.constant dense<0.000000e+00> : vector<1x8x8xf32>
    %7 = tpu.matmul %6, %4, %cst_6 {dimension_numbers = #tpu.dot_dimension_numbers<[2], [1], [1], [2], [0, 0, 0, 1, 1, 2], [0], [0]>} : vector<1x8x4xf32>, vector<1x4x8xf32>, vector<1x8x8xf32> -> vector<1x8x8xf32>
    "tpu.trace_stop"() : () -> ()
    %8 = arith.addf %2, %7 : vector<1x8x8xf32>
    %c0_7 = arith.constant 0 : index
    %c1 = arith.constant 1 : index
    %c0_8 = arith.constant 0 : index
    %c0_9 = arith.constant 0 : index
    %9 = vector.load %arg1[%c0_7, %c1, %c0_8, %c0_9] : memref<1x2x4x9xf32, #tpu.memory_space<vmem>>, vector<1x1x4x8xf32>
    %10 = vector.shape_cast %9 : vector<1x1x4x8xf32> to vector<1x4x8xf32>
    %11 = vector.extract_strided_slice %1 {offsets = [0, 1, 0, 0], sizes = [1, 1, 8, 4], strides = [1, 1, 1, 1]} : vector<1x4x8x4xf32> to vector<1x1x8x4xf32>
    %12 = vector.shape_cast %11 : vector<1x1x8x4xf32> to vector<1x8x4xf32>
    "tpu.trace_start"() <{level = 10 : i32, message = "boc,bcl->bol"}> : () -> ()
    %cst_10 = arith.constant dense<0.000000e+00> : vector<1x8x8xf32>
    %13 = tpu.matmul %12, %10, %cst_10 {dimension_numbers = #tpu.dot_dimension_numbers<[2], [1], [1], [2], [0, 0, 0, 1, 1, 2], [0], [0]>} : vector<1x8x4xf32>, vector<1x4x8xf32>, vector<1x8x8xf32> -> vector<1x8x8xf32>
    "tpu.trace_stop"() : () -> ()
    %14 = arith.addf %8, %13 : vector<1x8x8xf32>
    %c0_11 = arith.constant 0 : index
    %c0_12 = arith.constant 0 : index
    %c0_13 = arith.constant 0 : index
    %c1_14 = arith.constant 1 : index
    %15 = vector.load %arg1[%c0_11, %c0_12, %c0_13, %c1_14] : memref<1x2x4x9xf32, #tpu.memory_space<vmem>>, vector<1x1x4x8xf32>
    %16 = vector.shape_cast %15 : vector<1x1x4x8xf32> to vector<1x4x8xf32>
    %17 = vector.extract_strided_slice %1 {offsets = [0, 2, 0, 0], sizes = [1, 1, 8, 4], strides = [1, 1, 1, 1]} : vector<1x4x8x4xf32> to vector<1x1x8x4xf32>
    %18 = vector.shape_cast %17 : vector<1x1x8x4xf32> to vector<1x8x4xf32>
    "tpu.trace_start"() <{level = 10 : i32, message = "boc,bcl->bol"}> : () -> ()
    %cst_15 = arith.constant dense<0.000000e+00> : vector<1x8x8xf32>
    %19 = tpu.matmul %18, %16, %cst_15 {dimension_numbers = #tpu.dot_dimension_numbers<[2], [1], [1], [2], [0, 0, 0, 1, 1, 2], [0], [0]>} : vector<1x8x4xf32>, vector<1x4x8xf32>, vector<1x8x8xf32> -> vector<1x8x8xf32>
    "tpu.trace_stop"() : () -> ()
    %20 = arith.addf %14, %19 : vector<1x8x8xf32>
    %c0_16 = arith.constant 0 : index
    %c1_17 = arith.constant 1 : index
    %c0_18 = arith.constant 0 : index
    %c1_19 = arith.constant 1 : index
    %21 = vector.load %arg1[%c0_16, %c1_17, %c0_18, %c1_19] : memref<1x2x4x9xf32, #tpu.memory_space<vmem>>, vector<1x1x4x8xf32>
    %22 = vector.shape_cast %21 : vector<1x1x4x8xf32> to vector<1x4x8xf32>
    %23 = vector.extract_strided_slice %1 {offsets = [0, 3, 0, 0], sizes = [1, 1, 8, 4], strides = [1, 1, 1, 1]} : vector<1x4x8x4xf32> to vector<1x1x8x4xf32>
    %24 = vector.shape_cast %23 : vector<1x1x8x4xf32> to vector<1x8x4xf32>
    "tpu.trace_start"() <{level = 10 : i32, message = "boc,bcl->bol"}> : () -> ()
    %cst_20 = arith.constant dense<0.000000e+00> : vector<1x8x8xf32>
    %25 = tpu.matmul %24, %22, %cst_20 {dimension_numbers = #tpu.dot_dimension_numbers<[2], [1], [1], [2], [0, 0, 0, 1, 1, 2], [0], [0]>} : vector<1x8x4xf32>, vector<1x4x8xf32>, vector<1x8x8xf32> -> vector<1x8x8xf32>
    "tpu.trace_stop"() : () -> ()
    %26 = arith.addf %20, %25 : vector<1x8x8xf32>
    %c0_21 = arith.constant 0 : index
    %c0_22 = arith.constant 0 : index
    %27 = vector.load %arg3[%c0_21, %c0_22] : memref<8x1xf32, #tpu.memory_space<vmem>>, vector<8x1xf32>
    %28 = vector.shape_cast %27 : vector<8x1xf32> to vector<1x8x1xf32>
    %29 = vector.broadcast %28 : vector<1x8x1xf32> to vector<1x8x8xf32>
    %30 = arith.addf %26, %29 : vector<1x8x8xf32>
    %cst_23 = arith.constant dense<0.000000e+00> : vector<1x8xf32>
    %31 = vector.multi_reduction <add>, %30, %cst_23 [2] : vector<1x8x8xf32> to vector<1x8xf32>
    %32 = vector.shape_cast %31 : vector<1x8xf32> to vector<1x8x1xf32>
    %cst_24 = arith.constant 1.250000e-01 : f32
    %33 = vector.broadcast %cst_24 : f32 to vector<1x8x1xf32>
    %34 = arith.mulf %32, %33 : vector<1x8x1xf32>
    %35 = arith.mulf %30, %30 : vector<1x8x8xf32>
    %cst_25 = arith.constant dense<0.000000e+00> : vector<1x8xf32>
    %36 = vector.multi_reduction <add>, %35, %cst_25 [2] : vector<1x8x8xf32> to vector<1x8xf32>
    %37 = vector.shape_cast %36 : vector<1x8xf32> to vector<1x8x1xf32>
    %cst_26 = arith.constant 1.250000e-01 : f32
    %38 = vector.broadcast %cst_26 : f32 to vector<1x8x1xf32>
    %39 = arith.mulf %37, %38 : vector<1x8x1xf32>
    %40 = arith.mulf %34, %34 : vector<1x8x1xf32>
    %41 = arith.subf %39, %40 : vector<1x8x1xf32>
    %cst_27 = arith.constant 0.000000e+00 : f32
    %42 = vector.broadcast %cst_27 : f32 to vector<1x8x1xf32>
    %43 = arith.maximumf %41, %42 : vector<1x8x1xf32>
    %44 = vector.broadcast %34 : vector<1x8x1xf32> to vector<1x8x8xf32>
    %45 = arith.subf %30, %44 : vector<1x8x8xf32>
    %cst_28 = arith.constant 9.99999974E-6 : f32
    %46 = vector.broadcast %cst_28 : f32 to vector<1x8x1xf32>
    %47 = arith.addf %43, %46 : vector<1x8x1xf32>
    %48 = math.rsqrt %47 : vector<1x8x1xf32>
    %49 = vector.broadcast %48 : vector<1x8x1xf32> to vector<1x8x8xf32>
    %50 = arith.mulf %45, %49 : vector<1x8x8xf32>
    %cst_29 = arith.constant 0.000000e+00 : f32
    %51 = vector.broadcast %cst_29 : f32 to vector<1x8x8xf32>
    %52 = arith.maximumf %50, %51 : vector<1x8x8xf32>
    %c0_30 = arith.constant 0 : index
    %c0_31 = arith.constant 0 : index
    %c0_32 = arith.constant 0 : index
    %53 = vector.load %arg5[%c0_30, %c0_31, %c0_32] : memref<1x12x8xf32, #tpu.memory_space<vmem>>, vector<1x8x8xf32>
    tpu.vector_store %arg5[%c0_30, %c0_31, %c0_32], %52 {strides = array<i32>} : memref<1x12x8xf32, #tpu.memory_space<vmem>>, vector<1x8x8xf32>,
    %c0_33 = arith.constant 0 : index
    %c0_34 = arith.constant 0 : index
    %c0_35 = arith.constant 0 : index
    %54 = vector.load %arg4[%c0_33, %c0_34, %c0_35] : memref<1x4x8xf32, #tpu.memory_space<vmem>>, vector<1x4x8xf32>
    %c0_36 = arith.constant 0 : index
    %c8 = arith.constant 8 : index
    %c0_37 = arith.constant 0 : index
    %55 = vector.load %arg5[%c0_36, %c8, %c0_37] : memref<1x12x8xf32, #tpu.memory_space<vmem>>, vector<1x4x8xf32>
    tpu.vector_store %arg5[%c0_36, %c8, %c0_37], %54 {strides = array<i32>} : memref<1x12x8xf32, #tpu.memory_space<vmem>>, vector<1x4x8xf32>,
    return
  }
  func.func @transform_0(%arg0: i32) -> (i32, i32, i32, i32) {
    %c0_i32 = arith.constant 0 : i32
    %c0_i32_0 = arith.constant 0 : i32
    %c0_i32_1 = arith.constant 0 : i32
    %c0_i32_2 = arith.constant 0 : i32
    return %arg0, %c0_i32, %c0_i32_0, %c0_i32_1 : i32, i32, i32, i32
  }
  func.func @transform_1(%arg0: i32) -> (i32, i32, i32) {
    %c0_i32 = arith.constant 0 : i32
    %c0_i32_0 = arith.constant 0 : i32
    %c0_i32_1 = arith.constant 0 : i32
    %c0_i32_2 = arith.constant 0 : i32
    return %c0_i32, %c0_i32_0, %c0_i32_1 : i32, i32, i32
  }
  func.func @transform_2(%arg0: i32) -> (i32, i32) {
    %c0_i32 = arith.constant 0 : i32
    %c0_i32_0 = arith.constant 0 : i32
    %c0_i32_1 = arith.constant 0 : i32
    return %c0_i32, %c0_i32_0 : i32, i32
  }
  func.func @transform_3(%arg0: i32) -> (i32, i32, i32) {
    %c0_i32 = arith.constant 0 : i32
    %c0_i32_0 = arith.constant 0 : i32
    %c0_i32_1 = arith.constant 0 : i32
    return %arg0, %c0_i32, %c0_i32_0 : i32, i32, i32
  }
  func.func @transform_4(%arg0: i32) -> (i32, i32, i32) {
    %c0_i32 = arith.constant 0 : i32
    %c0_i32_0 = arith.constant 0 : i32
    %c0_i32_1 = arith.constant 0 : i32
    return %arg0, %c0_i32, %c0_i32_0 : i32, i32, i32
  }
}

module attributes {stable_mosaic.version = 11 : i64} {
  func.func @_label_branch_kernel(%arg0: memref<2x12xf32, #tpu.memory_space<vmem>>, %arg1: memref<4x4x1xf32, #tpu.memory_space<vmem>>, %arg2: memref<4x1xf32, #tpu.memory_space<vmem>>, %arg3: memref<4x1xf32, #tpu.memory_space<vmem>>, %arg4: memref<4x1xf32, #tpu.memory_space<vmem>>, %arg5: memref<4x4x4xf32, #tpu.memory_space<vmem>>, %arg6: memref<4x1xf32, #tpu.memory_space<vmem>>, %arg7: memref<4x1xf32, #tpu.memory_space<vmem>>, %arg8: memref<4x1xf32, #tpu.memory_space<vmem>>, %arg9: memref<2x4x8xf32, #tpu.memory_space<vmem>>, %arg10: memref<2x4x11xf32, #tpu.memory_space<vmem>>) attributes {dimension_semantics = [], scalar_prefetch = 0 : i64, scratch_operands = 1 : i64, tpu.core_type = #tpu.core_type<tc>} {
    %c0 = arith.constant 0 : index
    %c0_0 = arith.constant 0 : index
    %0 = vector.load %arg0[%c0, %c0_0] : memref<2x12xf32, #tpu.memory_space<vmem>>, vector<2x12xf32>
    %c0_1 = arith.constant 0 : index
    %c0_2 = arith.constant 0 : index
    %c0_3 = arith.constant 0 : index
    %1 = vector.load %arg1[%c0_1, %c0_2, %c0_3] : memref<4x4x1xf32, #tpu.memory_space<vmem>>, vector<4x4x1xf32>
    %cst = arith.constant 0.000000e+00 : f32
    %2 = vector.broadcast %cst : f32 to vector<2x4x9xf32>
    %3 = vector.extract_strided_slice %1 {offsets = [0, 0, 0], sizes = [1, 4, 1], strides = [1, 1, 1]} : vector<4x4x1xf32> to vector<1x4x1xf32>
    %4 = vector.shape_cast %3 : vector<1x4x1xf32> to vector<4x1xf32>
    %5 = vector.shape_cast %4 : vector<4x1xf32> to vector<1x4x1xf32>
    %6 = vector.extract_strided_slice %0 {offsets = [0, 0], sizes = [2, 9], strides = [1, 1]} : vector<2x12xf32> to vector<2x9xf32>
    %7 = vector.shape_cast %6 : vector<2x9xf32> to vector<2x1x9xf32>
    %8 = vector.broadcast %5 : vector<1x4x1xf32> to vector<2x4x9xf32>
    %9 = vector.broadcast %7 : vector<2x1x9xf32> to vector<2x4x9xf32>
    %10 = arith.mulf %8, %9 : vector<2x4x9xf32>
    %11 = arith.addf %2, %10 : vector<2x4x9xf32>
    %12 = vector.extract_strided_slice %1 {offsets = [1, 0, 0], sizes = [1, 4, 1], strides = [1, 1, 1]} : vector<4x4x1xf32> to vector<1x4x1xf32>
    %13 = vector.shape_cast %12 : vector<1x4x1xf32> to vector<4x1xf32>
    %14 = vector.shape_cast %13 : vector<4x1xf32> to vector<1x4x1xf32>
    %15 = vector.extract_strided_slice %0 {offsets = [0, 1], sizes = [2, 9], strides = [1, 1]} : vector<2x12xf32> to vector<2x9xf32>
    %16 = vector.shape_cast %15 : vector<2x9xf32> to vector<2x1x9xf32>
    %17 = vector.broadcast %14 : vector<1x4x1xf32> to vector<2x4x9xf32>
    %18 = vector.broadcast %16 : vector<2x1x9xf32> to vector<2x4x9xf32>
    %19 = arith.mulf %17, %18 : vector<2x4x9xf32>
    %20 = arith.addf %11, %19 : vector<2x4x9xf32>
    %21 = vector.extract_strided_slice %1 {offsets = [2, 0, 0], sizes = [1, 4, 1], strides = [1, 1, 1]} : vector<4x4x1xf32> to vector<1x4x1xf32>
    %22 = vector.shape_cast %21 : vector<1x4x1xf32> to vector<4x1xf32>
    %23 = vector.shape_cast %22 : vector<4x1xf32> to vector<1x4x1xf32>
    %24 = vector.extract_strided_slice %0 {offsets = [0, 2], sizes = [2, 9], strides = [1, 1]} : vector<2x12xf32> to vector<2x9xf32>
    %25 = vector.shape_cast %24 : vector<2x9xf32> to vector<2x1x9xf32>
    %26 = vector.broadcast %23 : vector<1x4x1xf32> to vector<2x4x9xf32>
    %27 = vector.broadcast %25 : vector<2x1x9xf32> to vector<2x4x9xf32>
    %28 = arith.mulf %26, %27 : vector<2x4x9xf32>
    %29 = arith.addf %20, %28 : vector<2x4x9xf32>
    %30 = vector.extract_strided_slice %1 {offsets = [3, 0, 0], sizes = [1, 4, 1], strides = [1, 1, 1]} : vector<4x4x1xf32> to vector<1x4x1xf32>
    %31 = vector.shape_cast %30 : vector<1x4x1xf32> to vector<4x1xf32>
    %32 = vector.shape_cast %31 : vector<4x1xf32> to vector<1x4x1xf32>
    %33 = vector.extract_strided_slice %0 {offsets = [0, 3], sizes = [2, 9], strides = [1, 1]} : vector<2x12xf32> to vector<2x9xf32>
    %34 = vector.shape_cast %33 : vector<2x9xf32> to vector<2x1x9xf32>
    %35 = vector.broadcast %32 : vector<1x4x1xf32> to vector<2x4x9xf32>
    %36 = vector.broadcast %34 : vector<2x1x9xf32> to vector<2x4x9xf32>
    %37 = arith.mulf %35, %36 : vector<2x4x9xf32>
    %38 = arith.addf %29, %37 : vector<2x4x9xf32>
    %c0_4 = arith.constant 0 : index
    %c0_5 = arith.constant 0 : index
    %39 = vector.load %arg2[%c0_4, %c0_5] : memref<4x1xf32, #tpu.memory_space<vmem>>, vector<4x1xf32>
    %40 = vector.shape_cast %39 : vector<4x1xf32> to vector<1x4x1xf32>
    %41 = vector.broadcast %40 : vector<1x4x1xf32> to vector<2x4x9xf32>
    %42 = arith.addf %38, %41 : vector<2x4x9xf32>
    %cst_6 = arith.constant dense<0.000000e+00> : vector<2x4xf32>
    %43 = vector.multi_reduction <add>, %42, %cst_6 [2] : vector<2x4x9xf32> to vector<2x4xf32>
    %44 = vector.shape_cast %43 : vector<2x4xf32> to vector<2x4x1xf32>
    %cst_7 = arith.constant dense<0.000000e+00> : vector<4x1xf32>
    %45 = vector.multi_reduction <add>, %44, %cst_7 [0] : vector<2x4x1xf32> to vector<4x1xf32>
    %46 = vector.shape_cast %45 : vector<4x1xf32> to vector<1x4x1xf32>
    %47 = arith.mulf %42, %42 : vector<2x4x9xf32>
    %cst_8 = arith.constant dense<0.000000e+00> : vector<2x4xf32>
    %48 = vector.multi_reduction <add>, %47, %cst_8 [2] : vector<2x4x9xf32> to vector<2x4xf32>
    %49 = vector.shape_cast %48 : vector<2x4xf32> to vector<2x4x1xf32>
    %cst_9 = arith.constant dense<0.000000e+00> : vector<4x1xf32>
    %50 = vector.multi_reduction <add>, %49, %cst_9 [0] : vector<2x4x1xf32> to vector<4x1xf32>
    %51 = vector.shape_cast %50 : vector<4x1xf32> to vector<1x4x1xf32>
    %cst_10 = arith.constant 0.055555556 : f32
    %52 = vector.broadcast %cst_10 : f32 to vector<1x4x1xf32>
    %53 = arith.mulf %46, %52 : vector<1x4x1xf32>
    %cst_11 = arith.constant 0.055555556 : f32
    %54 = vector.broadcast %cst_11 : f32 to vector<1x4x1xf32>
    %55 = arith.mulf %51, %54 : vector<1x4x1xf32>
    %56 = arith.mulf %53, %53 : vector<1x4x1xf32>
    %57 = arith.subf %55, %56 : vector<1x4x1xf32>
    %cst_12 = arith.constant 0.000000e+00 : f32
    %58 = vector.broadcast %cst_12 : f32 to vector<1x4x1xf32>
    %59 = arith.maximumf %57, %58 : vector<1x4x1xf32>
    %cst_13 = arith.constant 9.99999974E-6 : f32
    %60 = vector.broadcast %cst_13 : f32 to vector<1x4x1xf32>
    %61 = arith.addf %59, %60 : vector<1x4x1xf32>
    %62 = math.rsqrt %61 : vector<1x4x1xf32>
    %c0_14 = arith.constant 0 : index
    %c0_15 = arith.constant 0 : index
    %63 = vector.load %arg3[%c0_14, %c0_15] : memref<4x1xf32, #tpu.memory_space<vmem>>, vector<4x1xf32>
    %64 = vector.shape_cast %63 : vector<4x1xf32> to vector<1x4x1xf32>
    %65 = arith.mulf %62, %64 : vector<1x4x1xf32>
    %c0_16 = arith.constant 0 : index
    %c0_17 = arith.constant 0 : index
    %66 = vector.load %arg4[%c0_16, %c0_17] : memref<4x1xf32, #tpu.memory_space<vmem>>, vector<4x1xf32>
    %67 = vector.shape_cast %66 : vector<4x1xf32> to vector<1x4x1xf32>
    %68 = arith.mulf %53, %65 : vector<1x4x1xf32>
    %69 = arith.subf %67, %68 : vector<1x4x1xf32>
    %70 = vector.broadcast %65 : vector<1x4x1xf32> to vector<2x4x9xf32>
    %71 = arith.mulf %42, %70 : vector<2x4x9xf32>
    %72 = vector.broadcast %69 : vector<1x4x1xf32> to vector<2x4x9xf32>
    %73 = arith.addf %71, %72 : vector<2x4x9xf32>
    %cst_18 = arith.constant 0.000000e+00 : f32
    %74 = vector.broadcast %cst_18 : f32 to vector<2x4x9xf32>
    %75 = arith.maximumf %73, %74 : vector<2x4x9xf32>
    %cst_19 = arith.constant 0.000000e+00 : f32
    %76 = vector.broadcast %cst_19 : f32 to vector<2x4x1xf32>
    %c0_20 = arith.constant 0 : index
    %c0_21 = arith.constant 0 : index
    %c0_22 = arith.constant 0 : index
    %77 = vector.load %arg10[%c0_20, %c0_21, %c0_22] : memref<2x4x11xf32, #tpu.memory_space<vmem>>, vector<2x4x1xf32>
    tpu.vector_store %arg10[%c0_20, %c0_21, %c0_22], %76 {strides = array<i32>} : memref<2x4x11xf32, #tpu.memory_space<vmem>>, vector<2x4x1xf32>,
    %cst_23 = arith.constant 0.000000e+00 : f32
    %78 = vector.broadcast %cst_23 : f32 to vector<2x4x1xf32>
    %c0_24 = arith.constant 0 : index
    %c0_25 = arith.constant 0 : index
    %c10 = arith.constant 10 : index
    %79 = vector.load %arg10[%c0_24, %c0_25, %c10] : memref<2x4x11xf32, #tpu.memory_space<vmem>>, vector<2x4x1xf32>
    tpu.vector_store %arg10[%c0_24, %c0_25, %c10], %78 {strides = array<i32>} : memref<2x4x11xf32, #tpu.memory_space<vmem>>, vector<2x4x1xf32>,
    %c0_26 = arith.constant 0 : index
    %c0_27 = arith.constant 0 : index
    %c1 = arith.constant 1 : index
    %80 = vector.load %arg10[%c0_26, %c0_27, %c1] : memref<2x4x11xf32, #tpu.memory_space<vmem>>, vector<2x4x9xf32>
    tpu.vector_store %arg10[%c0_26, %c0_27, %c1], %75 {strides = array<i32>} : memref<2x4x11xf32, #tpu.memory_space<vmem>>, vector<2x4x9xf32>,
    %c0_28 = arith.constant 0 : index
    %c0_29 = arith.constant 0 : index
    %c0_30 = arith.constant 0 : index
    %81 = vector.load %arg10[%c0_28, %c0_29, %c0_30] : memref<2x4x11xf32, #tpu.memory_space<vmem>>, vector<2x4x11xf32>
    %c0_31 = arith.constant 0 : index
    %c0_32 = arith.constant 0 : index
    %c0_33 = arith.constant 0 : index
    %82 = vector.load %arg5[%c0_31, %c0_32, %c0_33] : memref<4x4x4xf32, #tpu.memory_space<vmem>>, vector<4x4x4xf32>
    %83 = vector.shape_cast %82 : vector<4x4x4xf32> to vector<1x4x4x4xf32>
    %84 = vector.shape_cast %83 : vector<1x4x4x4xf32> to vector<1x4x4x4xf32>
    %85 = vector.broadcast %84 : vector<1x4x4x4xf32> to vector<2x4x4x4xf32>
    %cst_34 = arith.constant 0.000000e+00 : f32
    %86 = vector.broadcast %cst_34 : f32 to vector<2x4x8xf32>
    %87 = vector.extract_strided_slice %85 {offsets = [0, 0, 0, 0], sizes = [2, 1, 4, 4], strides = [1, 1, 1, 1]} : vector<2x4x4x4xf32> to vector<2x1x4x4xf32>
    %88 = vector.shape_cast %87 : vector<2x1x4x4xf32> to vector<2x4x4xf32>
    %89 = vector.extract_strided_slice %81 {offsets = [0, 0, 0], sizes = [2, 4, 8], strides = [1, 1, 1]} : vector<2x4x11xf32> to vector<2x4x8xf32>
    "tpu.trace_start"() <{level = 10 : i32, message = "boc,bcl->bol"}> : () -> ()
    %cst_35 = arith.constant dense<0.000000e+00> : vector<2x4x8xf32>
    %90 = tpu.matmul %88, %89, %cst_35 {dimension_numbers = #tpu.dot_dimension_numbers<[2], [1], [1], [2], [0, 0, 0, 1, 1, 2], [0], [0]>} : vector<2x4x4xf32>, vector<2x4x8xf32>, vector<2x4x8xf32> -> vector<2x4x8xf32>
    "tpu.trace_stop"() : () -> ()
    %91 = arith.addf %86, %90 : vector<2x4x8xf32>
    %92 = vector.extract_strided_slice %85 {offsets = [0, 1, 0, 0], sizes = [2, 1, 4, 4], strides = [1, 1, 1, 1]} : vector<2x4x4x4xf32> to vector<2x1x4x4xf32>
    %93 = vector.shape_cast %92 : vector<2x1x4x4xf32> to vector<2x4x4xf32>
    %94 = vector.extract_strided_slice %81 {offsets = [0, 0, 1], sizes = [2, 4, 8], strides = [1, 1, 1]} : vector<2x4x11xf32> to vector<2x4x8xf32>
    "tpu.trace_start"() <{level = 10 : i32, message = "boc,bcl->bol"}> : () -> ()
    %cst_36 = arith.constant dense<0.000000e+00> : vector<2x4x8xf32>
    %95 = tpu.matmul %93, %94, %cst_36 {dimension_numbers = #tpu.dot_dimension_numbers<[2], [1], [1], [2], [0, 0, 0, 1, 1, 2], [0], [0]>} : vector<2x4x4xf32>, vector<2x4x8xf32>, vector<2x4x8xf32> -> vector<2x4x8xf32>
    "tpu.trace_stop"() : () -> ()
    %96 = arith.addf %91, %95 : vector<2x4x8xf32>
    %97 = vector.extract_strided_slice %85 {offsets = [0, 2, 0, 0], sizes = [2, 1, 4, 4], strides = [1, 1, 1, 1]} : vector<2x4x4x4xf32> to vector<2x1x4x4xf32>
    %98 = vector.shape_cast %97 : vector<2x1x4x4xf32> to vector<2x4x4xf32>
    %99 = vector.extract_strided_slice %81 {offsets = [0, 0, 2], sizes = [2, 4, 8], strides = [1, 1, 1]} : vector<2x4x11xf32> to vector<2x4x8xf32>
    "tpu.trace_start"() <{level = 10 : i32, message = "boc,bcl->bol"}> : () -> ()
    %cst_37 = arith.constant dense<0.000000e+00> : vector<2x4x8xf32>
    %100 = tpu.matmul %98, %99, %cst_37 {dimension_numbers = #tpu.dot_dimension_numbers<[2], [1], [1], [2], [0, 0, 0, 1, 1, 2], [0], [0]>} : vector<2x4x4xf32>, vector<2x4x8xf32>, vector<2x4x8xf32> -> vector<2x4x8xf32>
    "tpu.trace_stop"() : () -> ()
    %101 = arith.addf %96, %100 : vector<2x4x8xf32>
    %102 = vector.extract_strided_slice %85 {offsets = [0, 3, 0, 0], sizes = [2, 1, 4, 4], strides = [1, 1, 1, 1]} : vector<2x4x4x4xf32> to vector<2x1x4x4xf32>
    %103 = vector.shape_cast %102 : vector<2x1x4x4xf32> to vector<2x4x4xf32>
    %104 = vector.extract_strided_slice %81 {offsets = [0, 0, 3], sizes = [2, 4, 8], strides = [1, 1, 1]} : vector<2x4x11xf32> to vector<2x4x8xf32>
    "tpu.trace_start"() <{level = 10 : i32, message = "boc,bcl->bol"}> : () -> ()
    %cst_38 = arith.constant dense<0.000000e+00> : vector<2x4x8xf32>
    %105 = tpu.matmul %103, %104, %cst_38 {dimension_numbers = #tpu.dot_dimension_numbers<[2], [1], [1], [2], [0, 0, 0, 1, 1, 2], [0], [0]>} : vector<2x4x4xf32>, vector<2x4x8xf32>, vector<2x4x8xf32> -> vector<2x4x8xf32>
    "tpu.trace_stop"() : () -> ()
    %106 = arith.addf %101, %105 : vector<2x4x8xf32>
    %c0_39 = arith.constant 0 : index
    %c0_40 = arith.constant 0 : index
    %107 = vector.load %arg6[%c0_39, %c0_40] : memref<4x1xf32, #tpu.memory_space<vmem>>, vector<4x1xf32>
    %108 = vector.shape_cast %107 : vector<4x1xf32> to vector<1x4x1xf32>
    %109 = vector.broadcast %108 : vector<1x4x1xf32> to vector<2x4x8xf32>
    %110 = arith.addf %106, %109 : vector<2x4x8xf32>
    %cst_41 = arith.constant dense<0.000000e+00> : vector<2x4xf32>
    %111 = vector.multi_reduction <add>, %110, %cst_41 [2] : vector<2x4x8xf32> to vector<2x4xf32>
    %112 = vector.shape_cast %111 : vector<2x4xf32> to vector<2x4x1xf32>
    %cst_42 = arith.constant dense<0.000000e+00> : vector<4x1xf32>
    %113 = vector.multi_reduction <add>, %112, %cst_42 [0] : vector<2x4x1xf32> to vector<4x1xf32>
    %114 = vector.shape_cast %113 : vector<4x1xf32> to vector<1x4x1xf32>
    %115 = arith.mulf %110, %110 : vector<2x4x8xf32>
    %cst_43 = arith.constant dense<0.000000e+00> : vector<2x4xf32>
    %116 = vector.multi_reduction <add>, %115, %cst_43 [2] : vector<2x4x8xf32> to vector<2x4xf32>
    %117 = vector.shape_cast %116 : vector<2x4xf32> to vector<2x4x1xf32>
    %cst_44 = arith.constant dense<0.000000e+00> : vector<4x1xf32>
    %118 = vector.multi_reduction <add>, %117, %cst_44 [0] : vector<2x4x1xf32> to vector<4x1xf32>
    %119 = vector.shape_cast %118 : vector<4x1xf32> to vector<1x4x1xf32>
    %cst_45 = arith.constant 6.250000e-02 : f32
    %120 = vector.broadcast %cst_45 : f32 to vector<1x4x1xf32>
    %121 = arith.mulf %114, %120 : vector<1x4x1xf32>
    %cst_46 = arith.constant 6.250000e-02 : f32
    %122 = vector.broadcast %cst_46 : f32 to vector<1x4x1xf32>
    %123 = arith.mulf %119, %122 : vector<1x4x1xf32>
    %124 = arith.mulf %121, %121 : vector<1x4x1xf32>
    %125 = arith.subf %123, %124 : vector<1x4x1xf32>
    %cst_47 = arith.constant 0.000000e+00 : f32
    %126 = vector.broadcast %cst_47 : f32 to vector<1x4x1xf32>
    %127 = arith.maximumf %125, %126 : vector<1x4x1xf32>
    %cst_48 = arith.constant 9.99999974E-6 : f32
    %128 = vector.broadcast %cst_48 : f32 to vector<1x4x1xf32>
    %129 = arith.addf %127, %128 : vector<1x4x1xf32>
    %130 = math.rsqrt %129 : vector<1x4x1xf32>
    %c0_49 = arith.constant 0 : index
    %c0_50 = arith.constant 0 : index
    %131 = vector.load %arg7[%c0_49, %c0_50] : memref<4x1xf32, #tpu.memory_space<vmem>>, vector<4x1xf32>
    %132 = vector.shape_cast %131 : vector<4x1xf32> to vector<1x4x1xf32>
    %133 = arith.mulf %130, %132 : vector<1x4x1xf32>
    %c0_51 = arith.constant 0 : index
    %c0_52 = arith.constant 0 : index
    %134 = vector.load %arg8[%c0_51, %c0_52] : memref<4x1xf32, #tpu.memory_space<vmem>>, vector<4x1xf32>
    %135 = vector.shape_cast %134 : vector<4x1xf32> to vector<1x4x1xf32>
    %136 = arith.mulf %121, %133 : vector<1x4x1xf32>
    %137 = arith.subf %135, %136 : vector<1x4x1xf32>
    %138 = vector.broadcast %133 : vector<1x4x1xf32> to vector<2x4x8xf32>
    %139 = arith.mulf %110, %138 : vector<2x4x8xf32>
    %140 = vector.broadcast %137 : vector<1x4x1xf32> to vector<2x4x8xf32>
    %141 = arith.addf %139, %140 : vector<2x4x8xf32>
    %cst_53 = arith.constant 0.000000e+00 : f32
    %142 = vector.broadcast %cst_53 : f32 to vector<2x4x8xf32>
    %143 = arith.maximumf %141, %142 : vector<2x4x8xf32>
    %c0_54 = arith.constant 0 : index
    %c0_55 = arith.constant 0 : index
    %c0_56 = arith.constant 0 : index
    %144 = vector.load %arg9[%c0_54, %c0_55, %c0_56] : memref<2x4x8xf32, #tpu.memory_space<vmem>>, vector<2x4x8xf32>
    tpu.vector_store %arg9[%c0_54, %c0_55, %c0_56], %143 {strides = array<i32>} : memref<2x4x8xf32, #tpu.memory_space<vmem>>, vector<2x4x8xf32>,
    return
  }
}

</mosaic_0001>

<llo_original>
// kernel: dis_conv_label_emb_forward.3
$region0: #{dis_conv_label_emb_forward.3}
  #allocation0 [shape = 'u32[]', space=smem, size = 0x4, offset = 0x4, fixed_abs, tag = 'smem constant byte address 0x4 - core index']
  #allocation1 [shape = 'u32[144,128]{1,0:T(1,128)}', space=vmem, size = 0x12000, scoped, tag = 'internal scratch']
  %s0 = inlined_call_operand.vmem [shape: f32[2,2,4,9], index: 0, kind: input, shape index: {}]
  %s1 = inlined_call_operand.vmem [shape: f32[4,8,4], index: 1, kind: input, shape index: {}]
  %s2 = inlined_call_operand.vmem [shape: f32[8,1], index: 2, kind: input, shape index: {}]
  %s3 = inlined_call_operand.vmem [shape: f32[2,4,8], index: 3, kind: input, shape index: {}]
  %s4 = inlined_call_operand.vmem [shape: f32[2,12,8], index: 4, kind: output, shape index: {}]
  %s5 = sld [smem:[#allocation0]]
  $region49: #{dis_conv_label_emb_forward.3} parent=0
    _
  %s7 = ssub.s32 1, %s5
  %s8 = scalar_select 0, %s7, %s5
  loop: start=0, step=1, limit=4
  $region2: #{dis_conv_label_emb_forward.3} parent=0 // loop_pre_header
    _
  $region3: #{dis_conv_label_emb_forward.3} parent=0 // loop_header
    %s10 = sphi 0, %s14
    %p11 = scmp.ge.s32.totalorder %s10, 4
    %s20 = sphi 0, %s22
    %s23 = sphi 0, %s20
    %s24 = sphi 0, %s23
    %s40 = sphi 0, %s24
    %s44 = sphi 0, %s44
    %s46 = sphi 0, %s44
    %s47 = sphi 0, %s46
    %s61 = sphi 0, %s47
    %s65 = sphi 0, %s65
    %s67 = sphi 0, %s65
    %s68 = sphi 0, %s67
    %s82 = sphi 0, %s68
    %s88 = sphi 0, %s90
    %s91 = sphi 0, %s88
    %s92 = sphi 0, %s91
    %s108 = sphi 0, %s92
    %s114 = sphi 0, %s116
    %s117 = sphi 0, %s114
    %s118 = sphi 0, %s117
    %s134 = sphi 0, %s118
  $region4: #{dis_conv_label_emb_forward.3} parent=0 // loop_header_branch
    %13 = sbr.rel (%p11) target = $region8
  $region5: #{dis_conv_label_emb_forward.3} parent=0 // loop_body
    %s15 = ssub.s32 %s10, 1
    %s16 = ssub.s32 %s10, 2
    %s17 = sadd.s32 %s10, 1
    %s18 = ssub.s32 %s10, %s17
    %p19 = scmp.eq.s32.totalorder %s18, 0
    %s21 = sadd.s32 %s20, 1
    %s22 = scalar_select %p19, %s20, %s21
    %p25 = pneg %p19
    %p26 = scmp.eq.s32.totalorder %s10, 1
    %p27 = por %p25, %p26
    %p28 = scmp.ne.s32.totalorder %s20, %s23
    %p29 = scmp.eq.s32.totalorder %s10, 0
    %p30 = por %p28, %p29
    %p31 = scmp.ne.s32.totalorder %s20, %s23
    %p32 = scmp.eq.s32.totalorder %s15, 1
    %p33 = por %p31, %p32
    %p34 = scmp.ne.s32.totalorder %s23, %s24
    %p35 = scmp.eq.s32.totalorder %s15, 0
    %p36 = por %p34, %p35
    %p37 = scmp.ne.s32.totalorder %s23, %s24
    %p38 = scmp.eq.s32.totalorder %s16, 1
    %p39 = por %p37, %p38
    %p41 = scmp.ne.s32.totalorder %s24, %s40
    %p42 = scmp.eq.s32.totalorder %s16, 0
    %p43 = por %p41, %p42
    %s45 = sadd.s32 %s44, 1
    %p48 = scmp.eq.s32.totalorder %s10, 1
    %p49 = scmp.ne.s32.totalorder %s44, %s46
    %p50 = scmp.eq.s32.totalorder %s10, 0
    %p51 = por %p49, %p50
    %p52 = scmp.ne.s32.totalorder %s44, %s46
    %p53 = scmp.eq.s32.totalorder %s15, 1
    %p54 = por %p52, %p53
    %p55 = scmp.ne.s32.totalorder %s46, %s47
    %p56 = scmp.eq.s32.totalorder %s15, 0
    %p57 = por %p55, %p56
    %p58 = scmp.ne.s32.totalorder %s46, %s47
    %p59 = scmp.eq.s32.totalorder %s16, 1
    %p60 = por %p58, %p59
    %p62 = scmp.ne.s32.totalorder %s47, %s61
    %p63 = scmp.eq.s32.totalorder %s16, 0
    %p64 = por %p62, %p63
    %s66 = sadd.s32 %s65, 1
    %p69 = scmp.eq.s32.totalorder %s10, 1
    %p70 = scmp.ne.s32.totalorder %s65, %s67
    %p71 = scmp.eq.s32.totalorder %s10, 0
    %p72 = por %p70, %p71
    %p73 = scmp.ne.s32.totalorder %s65, %s67
    %p74 = scmp.eq.s32.totalorder %s15, 1
    %p75 = por %p73, %p74
    %p76 = scmp.ne.s32.totalorder %s67, %s68
    %p77 = scmp.eq.s32.totalorder %s15, 0
    %p78 = por %p76, %p77
    %p79 = scmp.ne.s32.totalorder %s67, %s68
    %p80 = scmp.eq.s32.totalorder %s16, 1
    %p81 = por %p79, %p80
    %p83 = scmp.ne.s32.totalorder %s68, %s82
    %p84 = scmp.eq.s32.totalorder %s16, 0
    %p85 = por %p83, %p84
    %s86 = ssub.s32 %s10, %s17
    %p87 = scmp.eq.s32.totalorder %s86, 0
    %s89 = sadd.s32 %s88, 1
    %s90 = scalar_select %p87, %s88, %s89
    %p93 = pneg %p87
    %p94 = scmp.eq.s32.totalorder %s10, 1
    %p95 = por %p93, %p94
    %p96 = scmp.ne.s32.totalorder %s88, %s91
    %p97 = scmp.eq.s32.totalorder %s10, 0
    %p98 = por %p96, %p97
    %p99 = scmp.ne.s32.totalorder %s88, %s91
    %p100 = scmp.eq.s32.totalorder %s15, 1
    %p101 = por %p99, %p100
    %p102 = scmp.ne.s32.totalorder %s91, %s92
    %p103 = scmp.eq.s32.totalorder %s15, 0
    %p104 = por %p102, %p103
    %p105 = scmp.ne.s32.totalorder %s91, %s92
    %p106 = scmp.eq.s32.totalorder %s16, 1
    %p107 = por %p105, %p106
    %p109 = scmp.ne.s32.totalorder %s92, %s108
    %p110 = scmp.eq.s32.totalorder %s16, 0
    %p111 = por %p109, %p110
    %s112 = ssub.s32 %s10, %s17
    %p113 = scmp.eq.s32.totalorder %s112, 0
    %s115 = sadd.s32 %s114, 1
    %s116 = scalar_select %p113, %s114, %s115
    %p119 = pneg %p113
    %p120 = scmp.eq.s32.totalorder %s10, 1
    %p121 = por %p119, %p120
    %p122 = scmp.ne.s32.totalorder %s114, %s117
    %p123 = scmp.eq.s32.totalorder %s10, 0
    %p124 = por %p122, %p123
    %p125 = scmp.ne.s32.totalorder %s114, %s117
    %p126 = scmp.eq.s32.totalorder %s15, 1
    %p127 = por %p125, %p126
    %p128 = scmp.ne.s32.totalorder %s117, %s118
    %p129 = scmp.eq.s32.totalorder %s15, 0
    %p130 = por %p128, %p129
    %p131 = scmp.ne.s32.totalorder %s117, %s118
    %p132 = scmp.eq.s32.totalorder %s16, 1
    %p133 = por %p131, %p132
    %p135 = scmp.ne.s32.totalorder %s118, %s134
    %p136 = scmp.eq.s32.totalorder %s16, 0
    %p137 = por %p135, %p136
    %p138 = scmp.le.s32.totalorder 1, %s10
    %p139 = scmp.lt.s32.totalorder %s10, 3
    %p140 = pnand %p138, %p139
    %p141 = pneg %p140
    // Predicated region
    $region9: #{dis_conv_label_emb_forward.3} parent=5 // pred_check
      _
    $region10: #{dis_conv_label_emb_forward.3} parent=5 // pred_check_branch
      %143 = sbr.rel (%p140) target = $region12
    $region11: #{dis_conv_label_emb_forward.3} parent=5 // pred_region
      %s144 = ssub.s32 %s10, 1
      // Predicated region
      $region13: #{dis_conv_label_emb_forward.3} parent=11 // pred_check
        %p145 = pneg %p57
      $region14: #{dis_conv_label_emb_forward.3} parent=11 // pred_check_branch
        %147 = sbr.rel (%p145) target = $region16
      $region15: #{dis_conv_label_emb_forward.3} parent=11 // pred_region
        _
      $region16: #{dis_conv_label_emb_forward.3} parent=11 // pred_fallthru
        _
      // Predicated region
      $region17: #{dis_conv_label_emb_forward.3} parent=11 // pred_check
        %p148 = pneg %p78
      $region18: #{dis_conv_label_emb_forward.3} parent=11 // pred_check_branch
        %150 = sbr.rel (%p148) target = $region20
      $region19: #{dis_conv_label_emb_forward.3} parent=11 // pred_region
        _
      $region20: #{dis_conv_label_emb_forward.3} parent=11 // pred_fallthru
        _
    $region12: #{dis_conv_label_emb_forward.3} parent=5 // pred_fallthru
      _
    %p151 = scmp.lt.s32.totalorder %s10, 2
    // Predicated region
    $region21: #{dis_conv_label_emb_forward.3} parent=5 // pred_check
      %p152 = pneg %p151
    $region22: #{dis_conv_label_emb_forward.3} parent=5 // pred_check_branch
      %154 = sbr.rel (%p152) target = $region24
    $region23: #{dis_conv_label_emb_forward.3} parent=5 // pred_region
      // Predicated region
      $region25: #{dis_conv_label_emb_forward.3} parent=23 // pred_check
        %p155 = pneg %p30
      $region26: #{dis_conv_label_emb_forward.3} parent=23 // pred_check_branch
        %157 = sbr.rel (%p155) target = $region28
      $region27: #{dis_conv_label_emb_forward.3} parent=23 // pred_region
        %p158 = scmp.lt.s32.totalorder %s10, 1
        %s159 = scalar_select %p158, %s10, 1
        %s160 = smul.addr %s159, 2
        %s161 = smul.addr %s160, 4
        %s162 = scalar_lea.vmem %s0, %s161
      $region28: #{dis_conv_label_emb_forward.3} parent=23 // pred_fallthru
        _
      // Predicated region
      $region29: #{dis_conv_label_emb_forward.3} parent=23 // pred_check
        %p163 = pneg %p98
      $region30: #{dis_conv_label_emb_forward.3} parent=23 // pred_check_branch
        %165 = sbr.rel (%p163) target = $region32
      $region31: #{dis_conv_label_emb_forward.3} parent=23 // pred_region
        %p166 = scmp.lt.s32.totalorder %s10, 1
        %s167 = scalar_select %p166, %s10, 1
        %s168 = smul.addr %s167, 4
        %s169 = scalar_lea.vmem %s3, %s168
      $region32: #{dis_conv_label_emb_forward.3} parent=23 // pred_fallthru
        _
    $region24: #{dis_conv_label_emb_forward.3} parent=5 // pred_fallthru
      _
    %p170 = scmp.le.s32.totalorder 1, %s10
    %p171 = scmp.lt.s32.totalorder %s10, 3
    %p172 = pnand %p170, %p171
    %p173 = pneg %p172
    // Predicated region
    $region33: #{dis_conv_label_emb_forward.3} parent=5 // pred_check
      _
    $region34: #{dis_conv_label_emb_forward.3} parent=5 // pred_check_branch
      %175 = sbr.rel (%p172) target = $region36
    $region35: #{dis_conv_label_emb_forward.3} parent=5 // pred_region
      %s176 = ssub.s32 %s10, 1
      %p177 = scmp.lt.s32.totalorder %s15, 1
      %s178 = scalar_select %p177, %s15, 1
      %s179 = smul.addr %s178, 2
      %s180 = smul.addr %s179, 4
      %s181 = scalar_lea.vmem %s0, %s180
      %p182 = pneg %p36
      %p183 = pneg %p33
      %p184 = pneg %p57
      %p185 = pneg %p54
      %p186 = pneg %p78
      %p187 = pneg %p75
      %p188 = scmp.lt.s32.totalorder %s15, 1
      %s189 = scalar_select %p188, %s15, 1
      %s190 = smul.addr %s189, 4
      %s191 = scalar_lea.vmem %s3, %s190
      %p192 = pneg %p104
      %p193 = pneg %p101
      %p194 = pneg %p130
      %p195 = pneg %p127
      %p196 = scmp.lt.s32.totalorder %s15, 1
      %s197 = scalar_select %p196, %s15, 1
      %s198 = smul.addr %s197, 2
      %s199 = smul.addr %s198, 8
      %s200 = scalar_lea.vmem %s4, %s199
      %p201 = scmp.lt.s32.totalorder %s15, 1
      %s202 = scalar_select %p201, %s15, 1
      %s203 = smul.addr %s202, 2
      %s204 = smul.addr %s203, 4
      %s205 = scalar_lea.vmem %s0, %s204
      %p206 = scmp.lt.s32.totalorder %s15, 1
      %s207 = scalar_select %p206, %s15, 1
      %s208 = smul.addr %s207, 4
      %s209 = scalar_lea.vmem %s3, %s208
      %p210 = scmp.lt.s32.totalorder %s15, 1
      %s211 = scalar_select %p210, %s15, 1
      %s212 = smul.addr %s211, 2
      %s213 = smul.addr %s212, 8
      %s214 = scalar_lea.vmem %s4, %s213
      %v215 = vld [vmem:[%s1] sm:$0xff]
      %v216 = vld [vmem:[%s1 + $0x8] sm:$0xff]
      %v217 = vld [vmem:[%s1 + $0x10] sm:$0xff]
      %v218 = vld [vmem:[%s1 + $0x18] sm:$0xff]
      %v219 = vld [vmem:[%s205] sm:$0xf]
      %s220 = scalar_lea.vmem %s205, 4
      %v221 = vld [vmem:[%s220] sm:$0xf]
      %vm222 = vcmask 31744
      %v224 = vsel %vm222, %v216, 0
      %vm226 = vcmask 1043456
      %v228 = vsel %vm226, %v221, 0
      %230 = vmatprep.subr.mxu0 0.0
      %231 = vmatpush1.msra.mxu0 0.0
      %232 = vmatprep.subr.mxu0 0.0
      %233 = vmatpush1.msra.mxu0 0.0
      %234 = vmatprep.subr.mxu0 0.0
      %235 = vmatpush1.msra.mxu0 0.0
      %236 = vmatprep.subr.mxu0 0.0
      %237 = vmatpush1.msra.mxu0 0.0
      %238 = vmatprep.subr.mxu0 0.0
      %239 = vmatpush1.msra.mxu0 0.0
      %240 = vmatprep.subr.mxu0 0.0
      %241 = vmatpush1.msra.mxu0 0.0
      %242 = vmatprep.subr.mxu0 0.0
      %243 = vmatpush1.msra.mxu0 0.0
      %244 = vmatprep.subr.mxu0 0.0
      %245 = vmatpush1.msra.mxu0 0.0
      %246 = vmatprep.subr.mxu0 0.0
      %247 = vmatpush1.msra.mxu0 0.0
      %248 = vmatprep.subr.mxu0 0.0
      %249 = vmatpush1.msra.mxu0 0.0
      %250 = vmatprep.subr.mxu0 0.0
      %251 = vmatpush1.msra.mxu0 0.0
      %252 = vmatprep.subr.mxu0 0.0
      %253 = vmatpush1.msra.mxu0 0.0
      %254 = vmatprep.subr.mxu0 0.0
      %255 = vmatpush1.msra.mxu0 0.0
      %256 = vmatprep.subr.mxu0 0.0
      %257 = vmatpush1.msra.mxu0 0.0
      %258 = vmatprep.subr.mxu0 0.0
      %259 = vmatpush1.msra.mxu0 0.0
      %260 = vmatprep.subr.mxu0 0.0
      %261 = vmatpush1.msra.mxu0 %v228
      %262 = vmatprep.subr.mxu0 0.0
      %263 = vmatpush2.msra.mxu0 0.0
      %264 = vmatprep.subr.mxu0 0.0
      %265 = vmatpush2.msra.mxu0 0.0
      %266 = vmatprep.subr.mxu0 0.0
      %267 = vmatpush2.msra.mxu0 0.0
      %268 = vmatprep.subr.mxu0 0.0
      %269 = vmatpush2.msra.mxu0 0.0
      %270 = vmatprep.subr.mxu0 0.0
      %271 = vmatpush2.msra.mxu0 0.0
      %272 = vmatprep.subr.mxu0 0.0
      %273 = vmatpush2.msra.mxu0 0.0
      %274 = vmatprep.subr.mxu0 0.0
      %275 = vmatpush2.msra.mxu0 0.0
      %276 = vmatprep.subr.mxu0 0.0
      %277 = vmatpush2.msra.mxu0 0.0
      %278 = vmatprep.subr.mxu0 0.0
      %279 = vmatpush2.msra.mxu0 0.0
      %280 = vmatprep.subr.mxu0 0.0
      %281 = vmatpush2.msra.mxu0 0.0
      %282 = vmatprep.subr.mxu0 0.0
      %283 = vmatpush2.msra.mxu0 0.0
      %284 = vmatprep.subr.mxu0 0.0
      %285 = vmatpush2.msra.mxu0 0.0
      %286 = vmatprep.subr.mxu0 0.0
      %287 = vmatpush2.msra.mxu0 0.0
      %288 = vmatprep.subr.mxu0 0.0
      %289 = vmatpush2.msra.mxu0 0.0
      %290 = vmatprep.subr.mxu0 0.0
      %291 = vmatpush2.msra.mxu0 0.0
      %292 = vmatprep.subr.mxu0 0.0
      %293 = vmatpush2.msra.mxu0 0.0
      %294 = vmatprep.mubr.f32.mxu0 0.0
      %295 = vmatmul.mubr.f32.gmra.mxu0 %v224
      %v296 = vpop.f32.mrf.mxu0
      %v297 = vadd.f32 0.0, %v296
      %v298 = vpop.f32.mrf.mxu0
      %299 = vdwg.mxu0
      %v301 = vsel %vm222, %v215, 0
      %v304 = vsel %vm226, %v219, 0
      %306 = vmatprep.subr.mxu0 0.0
      %307 = vmatpush1.msra.mxu0 0.0
      %308 = vmatprep.subr.mxu0 0.0
      %309 = vmatpush1.msra.mxu0 0.0
      %310 = vmatprep.subr.mxu0 0.0
      %311 = vmatpush1.msra.mxu0 0.0
      %312 = vmatprep.subr.mxu0 0.0
      %313 = vmatpush1.msra.mxu0 0.0
      %314 = vmatprep.subr.mxu0 0.0
      %315 = vmatpush1.msra.mxu0 0.0
      %316 = vmatprep.subr.mxu0 0.0
      %317 = vmatpush1.msra.mxu0 0.0
      %318 = vmatprep.subr.mxu0 0.0
      %319 = vmatpush1.msra.mxu0 0.0
      %320 = vmatprep.subr.mxu0 0.0
      %321 = vmatpush1.msra.mxu0 0.0
      %322 = vmatprep.subr.mxu0 0.0
      %323 = vmatpush1.msra.mxu0 0.0
      %324 = vmatprep.subr.mxu0 0.0
      %325 = vmatpush1.msra.mxu0 0.0
      %326 = vmatprep.subr.mxu0 0.0
      %327 = vmatpush1.msra.mxu0 0.0
      %328 = vmatprep.subr.mxu0 0.0
      %329 = vmatpush1.msra.mxu0 0.0
      %330 = vmatprep.subr.mxu0 0.0
      %331 = vmatpush1.msra.mxu0 0.0
      %332 = vmatprep.subr.mxu0 0.0
      %333 = vmatpush1.msra.mxu0 0.0
      %334 = vmatprep.subr.mxu0 0.0
      %335 = vmatpush1.msra.mxu0 0.0
      %336 = vmatprep.subr.mxu0 0.0
      %337 = vmatpush1.msra.mxu0 %v304
      %338 = vmatprep.subr.mxu0 0.0
      %339 = vmatpush2.msra.mxu0 0.0
      %340 = vmatprep.subr.mxu0 0.0
      %341 = vmatpush2.msra.mxu0 0.0
      %342 = vmatprep.subr.mxu0 0.0
      %343 = vmatpush2.msra.mxu0 0.0
      %344 = vmatprep.subr.mxu0 0.0
      %345 = vmatpush2.msra.mxu0 0.0
      %346 = vmatprep.subr.mxu0 0.0
      %347 = vmatpush2.msra.mxu0 0.0
      %348 = vmatprep.subr.mxu0 0.0
      %349 = vmatpush2.msra.mxu0 0.0
      %350 = vmatprep.subr.mxu0 0.0
      %351 = vmatpush2.msra.mxu0 0.0
      %352 = vmatprep.subr.mxu0 0.0
      %353 = vmatpush2.msra.mxu0 0.0
      %354 = vmatprep.subr.mxu0 0.0
      %355 = vmatpush2.msra.mxu0 0.0
      %356 = vmatprep.subr.mxu0 0.0
      %357 = vmatpush2.msra.mxu0 0.0
      %358 = vmatprep.subr.mxu0 0.0
      %359 = vmatpush2.msra.mxu0 0.0
      %360 = vmatprep.subr.mxu0 0.0
      %361 = vmatpush2.msra.mxu0 0.0
      %362 = vmatprep.subr.mxu0 0.0
      %363 = vmatpush2.msra.mxu0 0.0
      %364 = vmatprep.subr.mxu0 0.0
      %365 = vmatpush2.msra.mxu0 0.0
      %366 = vmatprep.subr.mxu0 0.0
      %367 = vmatpush2.msra.mxu0 0.0
      %368 = vmatprep.subr.mxu0 0.0
      %369 = vmatpush2.msra.mxu0 0.0
      %370 = vmatprep.mubr.f32.mxu0 0.0
      %371 = vmatmul.mubr.f32.gmra.mxu0 %v301
      %v372 = vpop.f32.mrf.mxu0
      %v373 = vadd.f32 %v297, %v372
      %v374 = vpop.f32.mrf.mxu0
      %375 = vdwg.mxu0
      %v376 = vld [vmem:[%s205] sm:$0xf]
      %378 = vrot.lane.b32.xlu0 %v376, 127
      %v379 = vpop.permute.xlu0 %378
      %v381 = vsel %vm222, %v217, 0
      %v383 = vsel %vm226, %v379, 0
      %385 = vmatprep.subr.mxu0 0.0
      %386 = vmatpush1.msra.mxu0 0.0
      %387 = vmatprep.subr.mxu0 0.0
      %388 = vmatpush1.msra.mxu0 0.0
      %389 = vmatprep.subr.mxu0 0.0
      %390 = vmatpush1.msra.mxu0 0.0
      %391 = vmatprep.subr.mxu0 0.0
      %392 = vmatpush1.msra.mxu0 0.0
      %393 = vmatprep.subr.mxu0 0.0
      %394 = vmatpush1.msra.mxu0 0.0
      %395 = vmatprep.subr.mxu0 0.0
      %396 = vmatpush1.msra.mxu0 0.0
      %397 = vmatprep.subr.mxu0 0.0
      %398 = vmatpush1.msra.mxu0 0.0
      %399 = vmatprep.subr.mxu0 0.0
      %400 = vmatpush1.msra.mxu0 0.0
      %401 = vmatprep.subr.mxu0 0.0
      %402 = vmatpush1.msra.mxu0 0.0
      %403 = vmatprep.subr.mxu0 0.0
      %404 = vmatpush1.msra.mxu0 0.0
      %405 = vmatprep.subr.mxu0 0.0
      %406 = vmatpush1.msra.mxu0 0.0
      %407 = vmatprep.subr.mxu0 0.0
      %408 = vmatpush1.msra.mxu0 0.0
      %409 = vmatprep.subr.mxu0 0.0
      %410 = vmatpush1.msra.mxu0 0.0
      %411 = vmatprep.subr.mxu0 0.0
      %412 = vmatpush1.msra.mxu0 0.0
      %413 = vmatprep.subr.mxu0 0.0
      %414 = vmatpush1.msra.mxu0 0.0
      %415 = vmatprep.subr.mxu0 0.0
      %416 = vmatpush1.msra.mxu0 %v383
      %417 = vmatprep.subr.mxu0 0.0
      %418 = vmatpush2.msra.mxu0 0.0
      %419 = vmatprep.subr.mxu0 0.0
      %420 = vmatpush2.msra.mxu0 0.0
      %421 = vmatprep.subr.mxu0 0.0
      %422 = vmatpush2.msra.mxu0 0.0
      %423 = vmatprep.subr.mxu0 0.0
      %424 = vmatpush2.msra.mxu0 0.0
      %425 = vmatprep.subr.mxu0 0.0
      %426 = vmatpush2.msra.mxu0 0.0
      %427 = vmatprep.subr.mxu0 0.0
      %428 = vmatpush2.msra.mxu0 0.0
      %429 = vmatprep.subr.mxu0 0.0
      %430 = vmatpush2.msra.mxu0 0.0
      %431 = vmatprep.subr.mxu0 0.0
      %432 = vmatpush2.msra.mxu0 0.0
      %433 = vmatprep.subr.mxu0 0.0
      %434 = vmatpush2.msra.mxu0 0.0
      %435 = vmatprep.subr.mxu0 0.0
      %436 = vmatpush2.msra.mxu0 0.0
      %437 = vmatprep.subr.mxu0 0.0
      %438 = vmatpush2.msra.mxu0 0.0
      %439 = vmatprep.subr.mxu0 0.0
      %440 = vmatpush2.msra.mxu0 0.0
      %441 = vmatprep.subr.mxu0 0.0
      %442 = vmatpush2.msra.mxu0 0.0
      %443 = vmatprep.subr.mxu0 0.0
      %444 = vmatpush2.msra.mxu0 0.0
      %445 = vmatprep.subr.mxu0 0.0
      %446 = vmatpush2.msra.mxu0 0.0
      %447 = vmatprep.subr.mxu0 0.0
      %448 = vmatpush2.msra.mxu0 0.0
      %449 = vmatprep.mubr.f32.mxu0 0.0
      %450 = vmatmul.mubr.f32.gmra.mxu0 %v381
      %v451 = vpop.f32.mrf.mxu0
      %v452 = vadd.f32 0.0, %v451
      %v453 = vpop.f32.mrf.mxu0
      %454 = vdwg.mxu0
      %v455 = vadd.f32 %v373, %v452
      %v456 = vld [vmem:[%s220] sm:$0xf]
      %458 = vrot.lane.b32.xlu0 %v456, 127
      %v459 = vpop.permute.xlu0 %458
      %v461 = vsel %vm222, %v218, 0
      %v463 = vsel %vm226, %v459, 0
      %465 = vmatprep.subr.mxu0 0.0
      %466 = vmatpush1.msra.mxu0 0.0
      %467 = vmatprep.subr.mxu0 0.0
      %468 = vmatpush1.msra.mxu0 0.0
      %469 = vmatprep.subr.mxu0 0.0
      %470 = vmatpush1.msra.mxu0 0.0
      %471 = vmatprep.subr.mxu0 0.0
      %472 = vmatpush1.msra.mxu0 0.0
      %473 = vmatprep.subr.mxu0 0.0
      %474 = vmatpush1.msra.mxu0 0.0
      %475 = vmatprep.subr.mxu0 0.0
      %476 = vmatpush1.msra.mxu0 0.0
      %477 = vmatprep.subr.mxu0 0.0
      %478 = vmatpush1.msra.mxu0 0.0
      %479 = vmatprep.subr.mxu0 0.0
      %480 = vmatpush1.msra.mxu0 0.0
      %481 = vmatprep.subr.mxu0 0.0
      %482 = vmatpush1.msra.mxu0 0.0
      %483 = vmatprep.subr.mxu0 0.0
      %484 = vmatpush1.msra.mxu0 0.0
      %485 = vmatprep.subr.mxu0 0.0
      %486 = vmatpush1.msra.mxu0 0.0
      %487 = vmatprep.subr.mxu0 0.0
      %488 = vmatpush1.msra.mxu0 0.0
      %489 = vmatprep.subr.mxu0 0.0
      %490 = vmatpush1.msra.mxu0 0.0
      %491 = vmatprep.subr.mxu0 0.0
      %492 = vmatpush1.msra.mxu0 0.0
      %493 = vmatprep.subr.mxu0 0.0
      %494 = vmatpush1.msra.mxu0 0.0
      %495 = vmatprep.subr.mxu0 0.0
      %496 = vmatpush1.msra.mxu0 %v463
      %497 = vmatprep.subr.mxu0 0.0
      %498 = vmatpush2.msra.mxu0 0.0
      %499 = vmatprep.subr.mxu0 0.0
      %500 = vmatpush2.msra.mxu0 0.0
      %501 = vmatprep.subr.mxu0 0.0
      %502 = vmatpush2.msra.mxu0 0.0
      %503 = vmatprep.subr.mxu0 0.0
      %504 = vmatpush2.msra.mxu0 0.0
      %505 = vmatprep.subr.mxu0 0.0
      %506 = vmatpush2.msra.mxu0 0.0
      %507 = vmatprep.subr.mxu0 0.0
      %508 = vmatpush2.msra.mxu0 0.0
      %509 = vmatprep.subr.mxu0 0.0
      %510 = vmatpush2.msra.mxu0 0.0
      %511 = vmatprep.subr.mxu0 0.0
      %512 = vmatpush2.msra.mxu0 0.0
      %513 = vmatprep.subr.mxu0 0.0
      %514 = vmatpush2.msra.mxu0 0.0
      %515 = vmatprep.subr.mxu0 0.0
      %516 = vmatpush2.msra.mxu0 0.0
      %517 = vmatprep.subr.mxu0 0.0
      %518 = vmatpush2.msra.mxu0 0.0
      %519 = vmatprep.subr.mxu0 0.0
      %520 = vmatpush2.msra.mxu0 0.0
      %521 = vmatprep.subr.mxu0 0.0
      %522 = vmatpush2.msra.mxu0 0.0
      %523 = vmatprep.subr.mxu0 0.0
      %524 = vmatpush2.msra.mxu0 0.0
      %525 = vmatprep.subr.mxu0 0.0
      %526 = vmatpush2.msra.mxu0 0.0
      %527 = vmatprep.subr.mxu0 0.0
      %528 = vmatpush2.msra.mxu0 0.0
      %529 = vmatprep.mubr.f32.mxu0 0.0
      %530 = vmatmul.mubr.f32.gmra.mxu0 %v461
      %v531 = vpop.f32.mrf.mxu0
      %v532 = vadd.f32 0.0, %v531
      %v533 = vpop.f32.mrf.mxu0
      %534 = vdwg.mxu0
      %v535 = vadd.f32 %v455, %v532
      %v536 = vld [vmem:[%s2] sm:$0xff]
      %538 = vset.pattern.permute.xlu0 0
      %539 = vperm.xlu0 %538, %v536
      %v540 = vpop.permute.xlu0 %539
      %v542 = vadd.f32 %v535, %v540
      %vm543 = vcmask 64512
      %v544 = vsel %vm543, %v542, 0.0
      %545 = vadd.xlane.f32.xlu0 %v544
      %v546 = vpop.xlane.xlu0 %545
      %v547 = vmul.f32 %v546, 0.125
      %v548 = vmul.f32 %v542, %v542
      %v549 = vsel %vm543, %v548, 0.0
      %550 = vadd.xlane.f32.xlu0 %v549
      %v551 = vpop.xlane.xlu0 %550
      %v552 = vmul.f32 %v551, 0.125
      %v553 = vmul.f32 %v547, %v547
      %v554 = vsub.f32 %v552, %v553
      %v555 = vmax.f32 %v554, 0.0
      %v556 = vsub.f32 %v542, %v547
      %v557 = vadd.f32 %v555, 1e-05
      %v558 = vrsqrt.pop %v557
      %v559 = vmul.f32 %v556, %v558
      %v560 = vmax.f32 %v559, 0.0
      %561 = vst.msk [vmem:[%s214] sm:$0xff] %vm543, %v560
      %v562 = vld [vmem:[%s209] sm:$0xf]
      %vm563 = vcmask 60416
      %564 = vst.msk [vmem:[%s214 + $0x8] sm:$0xf] %vm563, %v562
      %p565 = scmp.lt.s32.totalorder %s15, 1
      %s566 = scalar_select %p565, %s15, 1
      %s567 = smul.addr %s566, 2
      %s568 = smul.addr %s567, 8
      %s569 = scalar_lea.vmem %s4, %s568
      // Predicated region
      $region37: #{dis_conv_label_emb_forward.3} parent=35 // pred_check
        %p570 = pneg %p127
      $region38: #{dis_conv_label_emb_forward.3} parent=35 // pred_check_branch
        %572 = sbr.rel (%p570) target = $region40
      $region39: #{dis_conv_label_emb_forward.3} parent=35 // pred_region
        _
      $region40: #{dis_conv_label_emb_forward.3} parent=35 // pred_fallthru
        _
    $region36: #{dis_conv_label_emb_forward.3} parent=5 // pred_fallthru
      _
    %p573 = scmp.le.s32.totalorder 2, %s10
    // Predicated region
    $region41: #{dis_conv_label_emb_forward.3} parent=5 // pred_check
      %p574 = pneg %p573
    $region42: #{dis_conv_label_emb_forward.3} parent=5 // pred_check_branch
      %576 = sbr.rel (%p574) target = $region44
    $region43: #{dis_conv_label_emb_forward.3} parent=5 // pred_region
      %s577 = ssub.s32 %s10, 2
      // Predicated region
      $region45: #{dis_conv_label_emb_forward.3} parent=43 // pred_check
        %p578 = pneg %p133
      $region46: #{dis_conv_label_emb_forward.3} parent=43 // pred_check_branch
        %580 = sbr.rel (%p578) target = $region48
      $region47: #{dis_conv_label_emb_forward.3} parent=43 // pred_region
        %p581 = scmp.lt.s32.totalorder %s16, 1
        %s582 = scalar_select %p581, %s16, 1
        %s583 = smul.addr %s582, 2
        %s584 = smul.addr %s583, 8
        %s585 = scalar_lea.vmem %s4, %s584
      $region48: #{dis_conv_label_emb_forward.3} parent=43 // pred_fallthru
        _
    $region44: #{dis_conv_label_emb_forward.3} parent=5 // pred_fallthru
      _
  $region6: #{dis_conv_label_emb_forward.3} parent=0 // loop_footer
    %s14 = sadd.s32 1, %s10
  $region7: #{dis_conv_label_emb_forward.3} parent=0 // loop_footer_branch
    %9 = sbr.rel target = $region3
  $region8: #{dis_conv_label_emb_forward.3} parent=0 // loop_exit
    _

// kernel: dis_conv_label_emb_forward.2
$region0: #{dis_conv_label_emb_forward.2}
  #allocation0 [shape = 'u32[]', space=smem, size = 0x4, offset = 0x4, fixed_abs, tag = 'smem constant byte address 0x4 - core index']
  #allocation1 [shape = 'u32[144,128]{1,0:T(1,128)}', space=vmem, size = 0x12000, scoped, tag = 'internal scratch']
  #allocation2 [shape = 'f32[2,4,11]{2,1,0:T(4,128)}', space=vmem, size = 0x1000, scoped, tag = 'scratch operand']
  %s0 = inlined_call_operand.vmem [shape: f32[2,12], index: 0, kind: input, shape index: {}]
  %s1 = inlined_call_operand.vmem [shape: f32[4,4,1], index: 1, kind: input, shape index: {}]
  %s2 = inlined_call_operand.vmem [shape: f32[4,1], index: 2, kind: input, shape index: {}]
  %s3 = inlined_call_operand.vmem [shape: f32[4,1], index: 3, kind: input, shape index: {}]
  %s4 = inlined_call_operand.vmem [shape: f32[4,1], index: 4, kind: input, shape index: {}]
  %s5 = inlined_call_operand.vmem [shape: f32[4,4,4], index: 5, kind: input, shape index: {}]
  %s6 = inlined_call_operand.vmem [shape: f32[4,1], index: 6, kind: input, shape index: {}]
  %s7 = inlined_call_operand.vmem [shape: f32[4,1], index: 7, kind: input, shape index: {}]
  %s8 = inlined_call_operand.vmem [shape: f32[4,1], index: 8, kind: input, shape index: {}]
  %s9 = inlined_call_operand.vmem [shape: f32[2,4,8], index: 9, kind: output, shape index: {}]
  %s10 = sld [smem:[#allocation0]]
  $region46: #{dis_conv_label_emb_forward.2} parent=0
    _
  %s12 = ssub.s32 1, %s10
  %s13 = scalar_select 0, %s12, %s10
  // Predicated region
  $region2: #{dis_conv_label_emb_forward.2} parent=0 // pred_check
    _
  $region3: #{dis_conv_label_emb_forward.2} parent=0 // pred_check_branch
    %15 = sbr.rel (0) target = $region5
  $region4: #{dis_conv_label_emb_forward.2} parent=0 // pred_region
    _
  $region5: #{dis_conv_label_emb_forward.2} parent=0 // pred_fallthru
    _
  // Predicated region
  $region6: #{dis_conv_label_emb_forward.2} parent=0 // pred_check
    _
  $region7: #{dis_conv_label_emb_forward.2} parent=0 // pred_check_branch
    %17 = sbr.rel (0) target = $region9
  $region8: #{dis_conv_label_emb_forward.2} parent=0 // pred_region
    _
  $region9: #{dis_conv_label_emb_forward.2} parent=0 // pred_fallthru
    _
  // Predicated region
  $region10: #{dis_conv_label_emb_forward.2} parent=0 // pred_check
    _
  $region11: #{dis_conv_label_emb_forward.2} parent=0 // pred_check_branch
    %19 = sbr.rel (0) target = $region13
  $region12: #{dis_conv_label_emb_forward.2} parent=0 // pred_region
    _
  $region13: #{dis_conv_label_emb_forward.2} parent=0 // pred_fallthru
    _
  // Predicated region
  $region14: #{dis_conv_label_emb_forward.2} parent=0 // pred_check
    _
  $region15: #{dis_conv_label_emb_forward.2} parent=0 // pred_check_branch
    %21 = sbr.rel (0) target = $region17
  $region16: #{dis_conv_label_emb_forward.2} parent=0 // pred_region
    _
  $region17: #{dis_conv_label_emb_forward.2} parent=0 // pred_fallthru
    _
  // Predicated region
  $region18: #{dis_conv_label_emb_forward.2} parent=0 // pred_check
    _
  $region19: #{dis_conv_label_emb_forward.2} parent=0 // pred_check_branch
    %23 = sbr.rel (0) target = $region21
  $region20: #{dis_conv_label_emb_forward.2} parent=0 // pred_region
    _
  $region21: #{dis_conv_label_emb_forward.2} parent=0 // pred_fallthru
    _
  // Predicated region
  $region22: #{dis_conv_label_emb_forward.2} parent=0 // pred_check
    _
  $region23: #{dis_conv_label_emb_forward.2} parent=0 // pred_check_branch
    %25 = sbr.rel (0) target = $region25
  $region24: #{dis_conv_label_emb_forward.2} parent=0 // pred_region
    _
  $region25: #{dis_conv_label_emb_forward.2} parent=0 // pred_fallthru
    _
  // Predicated region
  $region26: #{dis_conv_label_emb_forward.2} parent=0 // pred_check
    _
  $region27: #{dis_conv_label_emb_forward.2} parent=0 // pred_check_branch
    %27 = sbr.rel (0) target = $region29
  $region28: #{dis_conv_label_emb_forward.2} parent=0 // pred_region
    _
  $region29: #{dis_conv_label_emb_forward.2} parent=0 // pred_fallthru
    _
  // Predicated region
  $region30: #{dis_conv_label_emb_forward.2} parent=0 // pred_check
    _
  $region31: #{dis_conv_label_emb_forward.2} parent=0 // pred_check_branch
    %29 = sbr.rel (0) target = $region33
  $region32: #{dis_conv_label_emb_forward.2} parent=0 // pred_region
    _
  $region33: #{dis_conv_label_emb_forward.2} parent=0 // pred_fallthru
    _
  // Predicated region
  $region34: #{dis_conv_label_emb_forward.2} parent=0 // pred_check
    _
  $region35: #{dis_conv_label_emb_forward.2} parent=0 // pred_check_branch
    %31 = sbr.rel (0) target = $region37
  $region36: #{dis_conv_label_emb_forward.2} parent=0 // pred_region
    _
  $region37: #{dis_conv_label_emb_forward.2} parent=0 // pred_fallthru
    _
  %v32 = vld [vmem:[%s0] sm:$0x3]
  %v33 = vld [vmem:[%s1] sm:$0xf]
  %v34 = vld [vmem:[%s1 + $0x4] sm:$0xf]
  %v35 = vld [vmem:[%s1 + $0x8] sm:$0xf]
  %v36 = vld [vmem:[%s1 + $0xc] sm:$0xf]
  %v39 = vunpack.c.l.s4 1966171168
  %v40 = vunpack.c.0.s8 %v39
  %v41 = vlaneseq
  %v42 = vshrl.u32 %v41, 7
  %v43 = vsub.s32 %v40, %v42
  %v44 = vrot.slane %v32, %v43
  %v45 = vcombine.high %v44, %v44
  %v47 = vunpack.c.l.s4 1966171168
  %v48 = vunpack.c.0.s8 %v47
  %v49 = vlaneseq
  %v50 = vshrl.u32 %v49, 7
  %v51 = vsub.s32 %v48, %v50
  %v52 = vrot.slane %v44, %v51
  %v54 = vunpack.c.l.s4 1966171168
  %v55 = vunpack.c.0.s8 %v54
  %v56 = vlaneseq
  %v57 = vshrl.u32 %v56, 7
  %v58 = vsub.s32 %v55, %v57
  %v59 = vrot.slane %v45, %v58
  %61 = vset.pattern.permute.xlu0 0
  %62 = vperm.xlu0 %61, %v33
  %v63 = vpop.permute.xlu0 %62
  %v65 = vlaneseq
  %v66 = vshrl.u32 %v65, 7
  %v67 = vsub.s32 0, %v66
  %v68 = vrot.slane %v52, %v67
  %v69 = vlaneseq
  %v70 = vshrl.u32 %v69, 7
  %v71 = vsub.s32 0, %v70
  %v72 = vrot.slane %v59, %v71
  %v75 = vmul.f32 %v63, %v68
  %v76 = vmul.f32 %v63, %v72
  %v77 = vadd.f32 %v75, 0.0
  %v78 = vadd.f32 %v76, 0.0
  %80 = vset.pattern.permute.xlu0 0
  %81 = vperm.xlu0 %80, %v34
  %v82 = vpop.permute.xlu0 %81
  %v84 = vmul.f32 %v82, %v68
  %v85 = vmul.f32 %v82, %v72
  %88 = vrot.lane.b32.xlu0 %v84, 127
  %v89 = vpop.permute.xlu0 %88
  %90 = vrot.lane.b32.xlu0 %v85, 127
  %v91 = vpop.permute.xlu0 %90
  %v94 = vadd.f32 %v77, %v89
  %v95 = vadd.f32 %v78, %v91
  %97 = vset.pattern.permute.xlu0 0
  %98 = vperm.xlu0 %97, %v35
  %v99 = vpop.permute.xlu0 %98
  %v101 = vmul.f32 %v99, %v68
  %v102 = vmul.f32 %v99, %v72
  %105 = vrot.lane.b32.xlu0 %v101, 126
  %v106 = vpop.permute.xlu0 %105
  %107 = vrot.lane.b32.xlu0 %v102, 126
  %v108 = vpop.permute.xlu0 %107
  %v111 = vadd.f32 %v94, %v106
  %v112 = vadd.f32 %v95, %v108
  %114 = vset.pattern.permute.xlu0 0
  %115 = vperm.xlu0 %114, %v36
  %v116 = vpop.permute.xlu0 %115
  %v118 = vmul.f32 %v116, %v68
  %v119 = vmul.f32 %v116, %v72
  %122 = vrot.lane.b32.xlu0 %v118, 125
  %v123 = vpop.permute.xlu0 %122
  %124 = vrot.lane.b32.xlu0 %v119, 125
  %v125 = vpop.permute.xlu0 %124
  %v128 = vadd.f32 %v111, %v123
  %v129 = vadd.f32 %v112, %v125
  %v130 = vld [vmem:[%s2] sm:$0xf]
  %132 = vset.pattern.permute.xlu0 0
  %133 = vperm.xlu0 %132, %v130
  %v134 = vpop.permute.xlu0 %133
  %v136 = vadd.f32 %v128, %v134
  %v137 = vadd.f32 %v129, %v134
  %vm138 = vcmask 68608
  %v139 = vsel %vm138, %v136, 0.0
  %140 = vadd.xlane.f32.xlu0 %v139
  %v141 = vpop.xlane.xlu0 %140
  %v142 = vsel %vm138, %v137, 0.0
  %143 = vadd.xlane.f32.xlu0 %v142
  %v144 = vpop.xlane.xlu0 %143
  %vm145 = vcmask 1043456
  %v146 = vsel %vm145, %v141, 0.0
  %v147 = vsel %vm145, %v144, 0.0
  %v148 = vadd.f32 %v146, %v147
  %v149 = vmul.f32 %v136, %v136
  %v150 = vmul.f32 %v137, %v137
  %v151 = vsel %vm138, %v149, 0.0
  %152 = vadd.xlane.f32.xlu0 %v151
  %v153 = vpop.xlane.xlu0 %152
  %v154 = vsel %vm138, %v150, 0.0
  %155 = vadd.xlane.f32.xlu0 %v154
  %v156 = vpop.xlane.xlu0 %155
  %v157 = vsel %vm145, %v153, 0.0
  %v158 = vsel %vm145, %v156, 0.0
  %v159 = vadd.f32 %v157, %v158
  %v160 = vmul.f32 %v148, 0.055555556
  %v161 = vmul.f32 %v159, 0.055555556
  %v162 = vmul.f32 %v160, %v160
  %v163 = vsub.f32 %v161, %v162
  %v164 = vmax.f32 %v163, 0.0
  %v165 = vadd.f32 %v164, 1e-05
  %v166 = vrsqrt.pop %v165
  %v167 = vld [vmem:[%s3] sm:$0xf]
  %v168 = vmul.f32 %v166, %v167
  %v169 = vld [vmem:[%s4] sm:$0xf]
  %v170 = vmul.f32 %v160, %v168
  %v171 = vsub.f32 %v169, %v170
  %173 = vset.pattern.permute.xlu0 0
  %174 = vperm.xlu0 %173, %v168
  %v175 = vpop.permute.xlu0 %174
  %v177 = vmul.f32 %v136, %v175
  %v178 = vmul.f32 %v137, %v175
  %180 = vset.pattern.permute.xlu0 0
  %181 = vperm.xlu0 %180, %v171
  %v182 = vpop.permute.xlu0 %181
  %v184 = vadd.f32 %v177, %v182
  %v185 = vadd.f32 %v178, %v182
  %v186 = vmax.f32 %v184, 0.0
  %v187 = vmax.f32 %v185, 0.0
  %vm188 = vcmask 3072
  %189 = vst.msk [vmem:[#allocation2] sm:$0xf] %vm188, 0.0
  %190 = vst.msk [vmem:[#allocation2 + $0x4] sm:$0xf] %vm188, 0.0
  %vm191 = vcmask 85072
  %192 = vst.msk [vmem:[#allocation2] sm:$0xf] %vm191, 0.0
  %193 = vst.msk [vmem:[#allocation2 + $0x4] sm:$0xf] %vm191, 0.0
  %196 = vrot.lane.b32.xlu0 %v186, 1
  %v197 = vpop.permute.xlu0 %196
  %198 = vrot.lane.b32.xlu0 %v187, 1
  %v199 = vpop.permute.xlu0 %198
  %vm202 = vcmask 76808
  %203 = vst.msk [vmem:[#allocation2] sm:$0xf] %vm202, %v197
  %204 = vst.msk [vmem:[#allocation2 + $0x4] sm:$0xf] %vm202, %v199
  %v205 = vld [vmem:[#allocation2] sm:$0xf]
  %v206 = vld [vmem:[#allocation2 + $0x4] sm:$0xf]
  %v207 = vld [vmem:[%s5] sm:$0xf]
  %v208 = vld [vmem:[%s5 + $0x4] sm:$0xf]
  %v209 = vld [vmem:[%s5 + $0x8] sm:$0xf]
  %v210 = vld [vmem:[%s5 + $0xc] sm:$0xf]
  %212 = vrot.lane.b32.xlu0 %v205, 127
  %v213 = vpop.permute.xlu0 %212
  %vm214 = vcmask 31744
  %v216 = vsel %vm214, %v208, 0
  %v218 = vsel %vm145, %v213, 0
  %220 = vmatprep.subr.mxu0 0.0
  %221 = vmatpush1.msra.mxu0 0.0
  %222 = vmatprep.subr.mxu0 0.0
  %223 = vmatpush1.msra.mxu0 0.0
  %224 = vmatprep.subr.mxu0 0.0
  %225 = vmatpush1.msra.mxu0 0.0
  %226 = vmatprep.subr.mxu0 0.0
  %227 = vmatpush1.msra.mxu0 0.0
  %228 = vmatprep.subr.mxu0 0.0
  %229 = vmatpush1.msra.mxu0 0.0
  %230 = vmatprep.subr.mxu0 0.0
  %231 = vmatpush1.msra.mxu0 0.0
  %232 = vmatprep.subr.mxu0 0.0
  %233 = vmatpush1.msra.mxu0 0.0
  %234 = vmatprep.subr.mxu0 0.0
  %235 = vmatpush1.msra.mxu0 0.0
  %236 = vmatprep.subr.mxu0 0.0
  %237 = vmatpush1.msra.mxu0 0.0
  %238 = vmatprep.subr.mxu0 0.0
  %239 = vmatpush1.msra.mxu0 0.0
  %240 = vmatprep.subr.mxu0 0.0
  %241 = vmatpush1.msra.mxu0 0.0
  %242 = vmatprep.subr.mxu0 0.0
  %243 = vmatpush1.msra.mxu0 0.0
  %244 = vmatprep.subr.mxu0 0.0
  %245 = vmatpush1.msra.mxu0 0.0
  %246 = vmatprep.subr.mxu0 0.0
  %247 = vmatpush1.msra.mxu0 0.0
  %248 = vmatprep.subr.mxu0 0.0
  %249 = vmatpush1.msra.mxu0 0.0
  %250 = vmatprep.subr.mxu0 0.0
  %251 = vmatpush1.msra.mxu0 %v218
  %252 = vmatprep.subr.mxu0 0.0
  %253 = vmatpush2.msra.mxu0 0.0
  %254 = vmatprep.subr.mxu0 0.0
  %255 = vmatpush2.msra.mxu0 0.0
  %256 = vmatprep.subr.mxu0 0.0
  %257 = vmatpush2.msra.mxu0 0.0
  %258 = vmatprep.subr.mxu0 0.0
  %259 = vmatpush2.msra.mxu0 0.0
  %260 = vmatprep.subr.mxu0 0.0
  %261 = vmatpush2.msra.mxu0 0.0
  %262 = vmatprep.subr.mxu0 0.0
  %263 = vmatpush2.msra.mxu0 0.0
  %264 = vmatprep.subr.mxu0 0.0
  %265 = vmatpush2.msra.mxu0 0.0
  %266 = vmatprep.subr.mxu0 0.0
  %267 = vmatpush2.msra.mxu0 0.0
  %268 = vmatprep.subr.mxu0 0.0
  %269 = vmatpush2.msra.mxu0 0.0
  %270 = vmatprep.subr.mxu0 0.0
  %271 = vmatpush2.msra.mxu0 0.0
  %272 = vmatprep.subr.mxu0 0.0
  %273 = vmatpush2.msra.mxu0 0.0
  %274 = vmatprep.subr.mxu0 0.0
  %275 = vmatpush2.msra.mxu0 0.0
  %276 = vmatprep.subr.mxu0 0.0
  %277 = vmatpush2.msra.mxu0 0.0
  %278 = vmatprep.subr.mxu0 0.0
  %279 = vmatpush2.msra.mxu0 0.0
  %280 = vmatprep.subr.mxu0 0.0
  %281 = vmatpush2.msra.mxu0 0.0
  %282 = vmatprep.subr.mxu0 0.0
  %283 = vmatpush2.msra.mxu0 0.0
  %284 = vmatprep.mubr.f32.mxu0 0.0
  %285 = vmatmul.mubr.f32.gmra.mxu0 %v216
  %v286 = vpop.f32.mrf.mxu0
  %v287 = vadd.f32 0.0, %v286
  %v288 = vpop.f32.mrf.mxu0
  %289 = vdwg.mxu0
  %291 = vrot.lane.b32.xlu0 %v206, 127
  %v292 = vpop.permute.xlu0 %291
  %v293 = vsel %vm145, %v292, 0
  %295 = vmatprep.subr.mxu0 0.0
  %296 = vmatpush1.msra.mxu0 0.0
  %297 = vmatprep.subr.mxu0 0.0
  %298 = vmatpush1.msra.mxu0 0.0
  %299 = vmatprep.subr.mxu0 0.0
  %300 = vmatpush1.msra.mxu0 0.0
  %301 = vmatprep.subr.mxu0 0.0
  %302 = vmatpush1.msra.mxu0 0.0
  %303 = vmatprep.subr.mxu0 0.0
  %304 = vmatpush1.msra.mxu0 0.0
  %305 = vmatprep.subr.mxu0 0.0
  %306 = vmatpush1.msra.mxu0 0.0
  %307 = vmatprep.subr.mxu0 0.0
  %308 = vmatpush1.msra.mxu0 0.0
  %309 = vmatprep.subr.mxu0 0.0
  %310 = vmatpush1.msra.mxu0 0.0
  %311 = vmatprep.subr.mxu0 0.0
  %312 = vmatpush1.msra.mxu0 0.0
  %313 = vmatprep.subr.mxu0 0.0
  %314 = vmatpush1.msra.mxu0 0.0
  %315 = vmatprep.subr.mxu0 0.0
  %316 = vmatpush1.msra.mxu0 0.0
  %317 = vmatprep.subr.mxu0 0.0
  %318 = vmatpush1.msra.mxu0 0.0
  %319 = vmatprep.subr.mxu0 0.0
  %320 = vmatpush1.msra.mxu0 0.0
  %321 = vmatprep.subr.mxu0 0.0
  %322 = vmatpush1.msra.mxu0 0.0
  %323 = vmatprep.subr.mxu0 0.0
  %324 = vmatpush1.msra.mxu0 0.0
  %325 = vmatprep.subr.mxu0 0.0
  %326 = vmatpush1.msra.mxu0 %v293
  %327 = vmatprep.subr.mxu0 0.0
  %328 = vmatpush2.msra.mxu0 0.0
  %329 = vmatprep.subr.mxu0 0.0
  %330 = vmatpush2.msra.mxu0 0.0
  %331 = vmatprep.subr.mxu0 0.0
  %332 = vmatpush2.msra.mxu0 0.0
  %333 = vmatprep.subr.mxu0 0.0
  %334 = vmatpush2.msra.mxu0 0.0
  %335 = vmatprep.subr.mxu0 0.0
  %336 = vmatpush2.msra.mxu0 0.0
  %337 = vmatprep.subr.mxu0 0.0
  %338 = vmatpush2.msra.mxu0 0.0
  %339 = vmatprep.subr.mxu0 0.0
  %340 = vmatpush2.msra.mxu0 0.0
  %341 = vmatprep.subr.mxu0 0.0
  %342 = vmatpush2.msra.mxu0 0.0
  %343 = vmatprep.subr.mxu0 0.0
  %344 = vmatpush2.msra.mxu0 0.0
  %345 = vmatprep.subr.mxu0 0.0
  %346 = vmatpush2.msra.mxu0 0.0
  %347 = vmatprep.subr.mxu0 0.0
  %348 = vmatpush2.msra.mxu0 0.0
  %349 = vmatprep.subr.mxu0 0.0
  %350 = vmatpush2.msra.mxu0 0.0
  %351 = vmatprep.subr.mxu0 0.0
  %352 = vmatpush2.msra.mxu0 0.0
  %353 = vmatprep.subr.mxu0 0.0
  %354 = vmatpush2.msra.mxu0 0.0
  %355 = vmatprep.subr.mxu0 0.0
  %356 = vmatpush2.msra.mxu0 0.0
  %357 = vmatprep.subr.mxu0 0.0
  %358 = vmatpush2.msra.mxu0 0.0
  %359 = vmatprep.mubr.f32.mxu0 0.0
  %360 = vmatmul.mubr.f32.gmra.mxu0 %v216
  %v361 = vpop.f32.mrf.mxu0
  %v362 = vadd.f32 0.0, %v361
  %v363 = vpop.f32.mrf.mxu0
  %364 = vdwg.mxu0
  %v366 = vsel %vm214, %v207, 0
  %v368 = vsel %vm145, %v205, 0
  %370 = vmatprep.subr.mxu0 0.0
  %371 = vmatpush1.msra.mxu0 0.0
  %372 = vmatprep.subr.mxu0 0.0
  %373 = vmatpush1.msra.mxu0 0.0
  %374 = vmatprep.subr.mxu0 0.0
  %375 = vmatpush1.msra.mxu0 0.0
  %376 = vmatprep.subr.mxu0 0.0
  %377 = vmatpush1.msra.mxu0 0.0
  %378 = vmatprep.subr.mxu0 0.0
  %379 = vmatpush1.msra.mxu0 0.0
  %380 = vmatprep.subr.mxu0 0.0
  %381 = vmatpush1.msra.mxu0 0.0
  %382 = vmatprep.subr.mxu0 0.0
  %383 = vmatpush1.msra.mxu0 0.0
  %384 = vmatprep.subr.mxu0 0.0
  %385 = vmatpush1.msra.mxu0 0.0
  %386 = vmatprep.subr.mxu0 0.0
  %387 = vmatpush1.msra.mxu0 0.0
  %388 = vmatprep.subr.mxu0 0.0
  %389 = vmatpush1.msra.mxu0 0.0
  %390 = vmatprep.subr.mxu0 0.0
  %391 = vmatpush1.msra.mxu0 0.0
  %392 = vmatprep.subr.mxu0 0.0
  %393 = vmatpush1.msra.mxu0 0.0
  %394 = vmatprep.subr.mxu0 0.0
  %395 = vmatpush1.msra.mxu0 0.0
  %396 = vmatprep.subr.mxu0 0.0
  %397 = vmatpush1.msra.mxu0 0.0
  %398 = vmatprep.subr.mxu0 0.0
  %399 = vmatpush1.msra.mxu0 0.0
  %400 = vmatprep.subr.mxu0 0.0
  %401 = vmatpush1.msra.mxu0 %v368
  %402 = vmatprep.subr.mxu0 0.0
  %403 = vmatpush2.msra.mxu0 0.0
  %404 = vmatprep.subr.mxu0 0.0
  %405 = vmatpush2.msra.mxu0 0.0
  %406 = vmatprep.subr.mxu0 0.0
  %407 = vmatpush2.msra.mxu0 0.0
  %408 = vmatprep.subr.mxu0 0.0
  %409 = vmatpush2.msra.mxu0 0.0
  %410 = vmatprep.subr.mxu0 0.0
  %411 = vmatpush2.msra.mxu0 0.0
  %412 = vmatprep.subr.mxu0 0.0
  %413 = vmatpush2.msra.mxu0 0.0
  %414 = vmatprep.subr.mxu0 0.0
  %415 = vmatpush2.msra.mxu0 0.0
  %416 = vmatprep.subr.mxu0 0.0
  %417 = vmatpush2.msra.mxu0 0.0
  %418 = vmatprep.subr.mxu0 0.0
  %419 = vmatpush2.msra.mxu0 0.0
  %420 = vmatprep.subr.mxu0 0.0
  %421 = vmatpush2.msra.mxu0 0.0
  %422 = vmatprep.subr.mxu0 0.0
  %423 = vmatpush2.msra.mxu0 0.0
  %424 = vmatprep.subr.mxu0 0.0
  %425 = vmatpush2.msra.mxu0 0.0
  %426 = vmatprep.subr.mxu0 0.0
  %427 = vmatpush2.msra.mxu0 0.0
  %428 = vmatprep.subr.mxu0 0.0
  %429 = vmatpush2.msra.mxu0 0.0
  %430 = vmatprep.subr.mxu0 0.0
  %431 = vmatpush2.msra.mxu0 0.0
  %432 = vmatprep.subr.mxu0 0.0
  %433 = vmatpush2.msra.mxu0 0.0
  %434 = vmatprep.mubr.f32.mxu0 0.0
  %435 = vmatmul.mubr.f32.gmra.mxu0 %v366
  %v436 = vpop.f32.mrf.mxu0
  %v437 = vadd.f32 %v287, %v436
  %v438 = vpop.f32.mrf.mxu0
  %439 = vdwg.mxu0
  %v440 = vsel %vm145, %v206, 0
  %442 = vmatprep.subr.mxu0 0.0
  %443 = vmatpush1.msra.mxu0 0.0
  %444 = vmatprep.subr.mxu0 0.0
  %445 = vmatpush1.msra.mxu0 0.0
  %446 = vmatprep.subr.mxu0 0.0
  %447 = vmatpush1.msra.mxu0 0.0
  %448 = vmatprep.subr.mxu0 0.0
  %449 = vmatpush1.msra.mxu0 0.0
  %450 = vmatprep.subr.mxu0 0.0
  %451 = vmatpush1.msra.mxu0 0.0
  %452 = vmatprep.subr.mxu0 0.0
  %453 = vmatpush1.msra.mxu0 0.0
  %454 = vmatprep.subr.mxu0 0.0
  %455 = vmatpush1.msra.mxu0 0.0
  %456 = vmatprep.subr.mxu0 0.0
  %457 = vmatpush1.msra.mxu0 0.0
  %458 = vmatprep.subr.mxu0 0.0
  %459 = vmatpush1.msra.mxu0 0.0
  %460 = vmatprep.subr.mxu0 0.0
  %461 = vmatpush1.msra.mxu0 0.0
  %462 = vmatprep.subr.mxu0 0.0
  %463 = vmatpush1.msra.mxu0 0.0
  %464 = vmatprep.subr.mxu0 0.0
  %465 = vmatpush1.msra.mxu0 0.0
  %466 = vmatprep.subr.mxu0 0.0
  %467 = vmatpush1.msra.mxu0 0.0
  %468 = vmatprep.subr.mxu0 0.0
  %469 = vmatpush1.msra.mxu0 0.0
  %470 = vmatprep.subr.mxu0 0.0
  %471 = vmatpush1.msra.mxu0 0.0
  %472 = vmatprep.subr.mxu0 0.0
  %473 = vmatpush1.msra.mxu0 %v440
  %474 = vmatprep.subr.mxu0 0.0
  %475 = vmatpush2.msra.mxu0 0.0
  %476 = vmatprep.subr.mxu0 0.0
  %477 = vmatpush2.msra.mxu0 0.0
  %478 = vmatprep.subr.mxu0 0.0
  %479 = vmatpush2.msra.mxu0 0.0
  %480 = vmatprep.subr.mxu0 0.0
  %481 = vmatpush2.msra.mxu0 0.0
  %482 = vmatprep.subr.mxu0 0.0
  %483 = vmatpush2.msra.mxu0 0.0
  %484 = vmatprep.subr.mxu0 0.0
  %485 = vmatpush2.msra.mxu0 0.0
  %486 = vmatprep.subr.mxu0 0.0
  %487 = vmatpush2.msra.mxu0 0.0
  %488 = vmatprep.subr.mxu0 0.0
  %489 = vmatpush2.msra.mxu0 0.0
  %490 = vmatprep.subr.mxu0 0.0
  %491 = vmatpush2.msra.mxu0 0.0
  %492 = vmatprep.subr.mxu0 0.0
  %493 = vmatpush2.msra.mxu0 0.0
  %494 = vmatprep.subr.mxu0 0.0
  %495 = vmatpush2.msra.mxu0 0.0
  %496 = vmatprep.subr.mxu0 0.0
  %497 = vmatpush2.msra.mxu0 0.0
  %498 = vmatprep.subr.mxu0 0.0
  %499 = vmatpush2.msra.mxu0 0.0
  %500 = vmatprep.subr.mxu0 0.0
  %501 = vmatpush2.msra.mxu0 0.0
  %502 = vmatprep.subr.mxu0 0.0
  %503 = vmatpush2.msra.mxu0 0.0
  %504 = vmatprep.subr.mxu0 0.0
  %505 = vmatpush2.msra.mxu0 0.0
  %506 = vmatprep.mubr.f32.mxu0 0.0
  %507 = vmatmul.mubr.f32.gmra.mxu0 %v366
  %v508 = vpop.f32.mrf.mxu0
  %v509 = vadd.f32 %v362, %v508
  %v510 = vpop.f32.mrf.mxu0
  %511 = vdwg.mxu0
  %512 = vrot.lane.b32.xlu0 %v205, 126
  %v513 = vpop.permute.xlu0 %512
  %v515 = vsel %vm214, %v209, 0
  %v517 = vsel %vm145, %v513, 0
  %519 = vmatprep.subr.mxu0 0.0
  %520 = vmatpush1.msra.mxu0 0.0
  %521 = vmatprep.subr.mxu0 0.0
  %522 = vmatpush1.msra.mxu0 0.0
  %523 = vmatprep.subr.mxu0 0.0
  %524 = vmatpush1.msra.mxu0 0.0
  %525 = vmatprep.subr.mxu0 0.0
  %526 = vmatpush1.msra.mxu0 0.0
  %527 = vmatprep.subr.mxu0 0.0
  %528 = vmatpush1.msra.mxu0 0.0
  %529 = vmatprep.subr.mxu0 0.0
  %530 = vmatpush1.msra.mxu0 0.0
  %531 = vmatprep.subr.mxu0 0.0
  %532 = vmatpush1.msra.mxu0 0.0
  %533 = vmatprep.subr.mxu0 0.0
  %534 = vmatpush1.msra.mxu0 0.0
  %535 = vmatprep.subr.mxu0 0.0
  %536 = vmatpush1.msra.mxu0 0.0
  %537 = vmatprep.subr.mxu0 0.0
  %538 = vmatpush1.msra.mxu0 0.0
  %539 = vmatprep.subr.mxu0 0.0
  %540 = vmatpush1.msra.mxu0 0.0
  %541 = vmatprep.subr.mxu0 0.0
  %542 = vmatpush1.msra.mxu0 0.0
  %543 = vmatprep.subr.mxu0 0.0
  %544 = vmatpush1.msra.mxu0 0.0
  %545 = vmatprep.subr.mxu0 0.0
  %546 = vmatpush1.msra.mxu0 0.0
  %547 = vmatprep.subr.mxu0 0.0
  %548 = vmatpush1.msra.mxu0 0.0
  %549 = vmatprep.subr.mxu0 0.0
  %550 = vmatpush1.msra.mxu0 %v517
  %551 = vmatprep.subr.mxu0 0.0
  %552 = vmatpush2.msra.mxu0 0.0
  %553 = vmatprep.subr.mxu0 0.0
  %554 = vmatpush2.msra.mxu0 0.0
  %555 = vmatprep.subr.mxu0 0.0
  %556 = vmatpush2.msra.mxu0 0.0
  %557 = vmatprep.subr.mxu0 0.0
  %558 = vmatpush2.msra.mxu0 0.0
  %559 = vmatprep.subr.mxu0 0.0
  %560 = vmatpush2.msra.mxu0 0.0
  %561 = vmatprep.subr.mxu0 0.0
  %562 = vmatpush2.msra.mxu0 0.0
  %563 = vmatprep.subr.mxu0 0.0
  %564 = vmatpush2.msra.mxu0 0.0
  %565 = vmatprep.subr.mxu0 0.0
  %566 = vmatpush2.msra.mxu0 0.0
  %567 = vmatprep.subr.mxu0 0.0
  %568 = vmatpush2.msra.mxu0 0.0
  %569 = vmatprep.subr.mxu0 0.0
  %570 = vmatpush2.msra.mxu0 0.0
  %571 = vmatprep.subr.mxu0 0.0
  %572 = vmatpush2.msra.mxu0 0.0
  %573 = vmatprep.subr.mxu0 0.0
  %574 = vmatpush2.msra.mxu0 0.0
  %575 = vmatprep.subr.mxu0 0.0
  %576 = vmatpush2.msra.mxu0 0.0
  %577 = vmatprep.subr.mxu0 0.0
  %578 = vmatpush2.msra.mxu0 0.0
  %579 = vmatprep.subr.mxu0 0.0
  %580 = vmatpush2.msra.mxu0 0.0
  %581 = vmatprep.subr.mxu0 0.0
  %582 = vmatpush2.msra.mxu0 0.0
  %583 = vmatprep.mubr.f32.mxu0 0.0
  %584 = vmatmul.mubr.f32.gmra.mxu0 %v515
  %v585 = vpop.f32.mrf.mxu0
  %v586 = vadd.f32 0.0, %v585
  %v587 = vpop.f32.mrf.mxu0
  %588 = vdwg.mxu0
  %589 = vrot.lane.b32.xlu0 %v206, 126
  %v590 = vpop.permute.xlu0 %589
  %v591 = vsel %vm145, %v590, 0
  %593 = vmatprep.subr.mxu0 0.0
  %594 = vmatpush1.msra.mxu0 0.0
  %595 = vmatprep.subr.mxu0 0.0
  %596 = vmatpush1.msra.mxu0 0.0
  %597 = vmatprep.subr.mxu0 0.0
  %598 = vmatpush1.msra.mxu0 0.0
  %599 = vmatprep.subr.mxu0 0.0
  %600 = vmatpush1.msra.mxu0 0.0
  %601 = vmatprep.subr.mxu0 0.0
  %602 = vmatpush1.msra.mxu0 0.0
  %603 = vmatprep.subr.mxu0 0.0
  %604 = vmatpush1.msra.mxu0 0.0
  %605 = vmatprep.subr.mxu0 0.0
  %606 = vmatpush1.msra.mxu0 0.0
  %607 = vmatprep.subr.mxu0 0.0
  %608 = vmatpush1.msra.mxu0 0.0
  %609 = vmatprep.subr.mxu0 0.0
  %610 = vmatpush1.msra.mxu0 0.0
  %611 = vmatprep.subr.mxu0 0.0
  %612 = vmatpush1.msra.mxu0 0.0
  %613 = vmatprep.subr.mxu0 0.0
  %614 = vmatpush1.msra.mxu0 0.0
  %615 = vmatprep.subr.mxu0 0.0
  %616 = vmatpush1.msra.mxu0 0.0
  %617 = vmatprep.subr.mxu0 0.0
  %618 = vmatpush1.msra.mxu0 0.0
  %619 = vmatprep.subr.mxu0 0.0
  %620 = vmatpush1.msra.mxu0 0.0
  %621 = vmatprep.subr.mxu0 0.0
  %622 = vmatpush1.msra.mxu0 0.0
  %623 = vmatprep.subr.mxu0 0.0
  %624 = vmatpush1.msra.mxu0 %v591
  %625 = vmatprep.subr.mxu0 0.0
  %626 = vmatpush2.msra.mxu0 0.0
  %627 = vmatprep.subr.mxu0 0.0
  %628 = vmatpush2.msra.mxu0 0.0
  %629 = vmatprep.subr.mxu0 0.0
  %630 = vmatpush2.msra.mxu0 0.0
  %631 = vmatprep.subr.mxu0 0.0
  %632 = vmatpush2.msra.mxu0 0.0
  %633 = vmatprep.subr.mxu0 0.0
  %634 = vmatpush2.msra.mxu0 0.0
  %635 = vmatprep.subr.mxu0 0.0
  %636 = vmatpush2.msra.mxu0 0.0
  %637 = vmatprep.subr.mxu0 0.0
  %638 = vmatpush2.msra.mxu0 0.0
  %639 = vmatprep.subr.mxu0 0.0
  %640 = vmatpush2.msra.mxu0 0.0
  %641 = vmatprep.subr.mxu0 0.0
  %642 = vmatpush2.msra.mxu0 0.0
  %643 = vmatprep.subr.mxu0 0.0
  %644 = vmatpush2.msra.mxu0 0.0
  %645 = vmatprep.subr.mxu0 0.0
  %646 = vmatpush2.msra.mxu0 0.0
  %647 = vmatprep.subr.mxu0 0.0
  %648 = vmatpush2.msra.mxu0 0.0
  %649 = vmatprep.subr.mxu0 0.0
  %650 = vmatpush2.msra.mxu0 0.0
  %651 = vmatprep.subr.mxu0 0.0
  %652 = vmatpush2.msra.mxu0 0.0
  %653 = vmatprep.subr.mxu0 0.0
  %654 = vmatpush2.msra.mxu0 0.0
  %655 = vmatprep.subr.mxu0 0.0
  %656 = vmatpush2.msra.mxu0 0.0
  %657 = vmatprep.mubr.f32.mxu0 0.0
  %658 = vmatmul.mubr.f32.gmra.mxu0 %v515
  %v659 = vpop.f32.mrf.mxu0
  %v660 = vadd.f32 0.0, %v659
  %v661 = vpop.f32.mrf.mxu0
  %662 = vdwg.mxu0
  %v663 = vadd.f32 %v437, %v586
  %v664 = vadd.f32 %v509, %v660
  %665 = vrot.lane.b32.xlu0 %v205, 125
  %v666 = vpop.permute.xlu0 %665
  %v668 = vsel %vm214, %v210, 0
  %v670 = vsel %vm145, %v666, 0
  %672 = vmatprep.subr.mxu0 0.0
  %673 = vmatpush1.msra.mxu0 0.0
  %674 = vmatprep.subr.mxu0 0.0
  %675 = vmatpush1.msra.mxu0 0.0
  %676 = vmatprep.subr.mxu0 0.0
  %677 = vmatpush1.msra.mxu0 0.0
  %678 = vmatprep.subr.mxu0 0.0
  %679 = vmatpush1.msra.mxu0 0.0
  %680 = vmatprep.subr.mxu0 0.0
  %681 = vmatpush1.msra.mxu0 0.0
  %682 = vmatprep.subr.mxu0 0.0
  %683 = vmatpush1.msra.mxu0 0.0
  %684 = vmatprep.subr.mxu0 0.0
  %685 = vmatpush1.msra.mxu0 0.0
  %686 = vmatprep.subr.mxu0 0.0
  %687 = vmatpush1.msra.mxu0 0.0
  %688 = vmatprep.subr.mxu0 0.0
  %689 = vmatpush1.msra.mxu0 0.0
  %690 = vmatprep.subr.mxu0 0.0
  %691 = vmatpush1.msra.mxu0 0.0
  %692 = vmatprep.subr.mxu0 0.0
  %693 = vmatpush1.msra.mxu0 0.0
  %694 = vmatprep.subr.mxu0 0.0
  %695 = vmatpush1.msra.mxu0 0.0
  %696 = vmatprep.subr.mxu0 0.0
  %697 = vmatpush1.msra.mxu0 0.0
  %698 = vmatprep.subr.mxu0 0.0
  %699 = vmatpush1.msra.mxu0 0.0
  %700 = vmatprep.subr.mxu0 0.0
  %701 = vmatpush1.msra.mxu0 0.0
  %702 = vmatprep.subr.mxu0 0.0
  %703 = vmatpush1.msra.mxu0 %v670
  %704 = vmatprep.subr.mxu0 0.0
  %705 = vmatpush2.msra.mxu0 0.0
  %706 = vmatprep.subr.mxu0 0.0
  %707 = vmatpush2.msra.mxu0 0.0
  %708 = vmatprep.subr.mxu0 0.0
  %709 = vmatpush2.msra.mxu0 0.0
  %710 = vmatprep.subr.mxu0 0.0
  %711 = vmatpush2.msra.mxu0 0.0
  %712 = vmatprep.subr.mxu0 0.0
  %713 = vmatpush2.msra.mxu0 0.0
  %714 = vmatprep.subr.mxu0 0.0
  %715 = vmatpush2.msra.mxu0 0.0
  %716 = vmatprep.subr.mxu0 0.0
  %717 = vmatpush2.msra.mxu0 0.0
  %718 = vmatprep.subr.mxu0 0.0
  %719 = vmatpush2.msra.mxu0 0.0
  %720 = vmatprep.subr.mxu0 0.0
  %721 = vmatpush2.msra.mxu0 0.0
  %722 = vmatprep.subr.mxu0 0.0
  %723 = vmatpush2.msra.mxu0 0.0
  %724 = vmatprep.subr.mxu0 0.0
  %725 = vmatpush2.msra.mxu0 0.0
  %726 = vmatprep.subr.mxu0 0.0
  %727 = vmatpush2.msra.mxu0 0.0
  %728 = vmatprep.subr.mxu0 0.0
  %729 = vmatpush2.msra.mxu0 0.0
  %730 = vmatprep.subr.mxu0 0.0
  %731 = vmatpush2.msra.mxu0 0.0
  %732 = vmatprep.subr.mxu0 0.0
  %733 = vmatpush2.msra.mxu0 0.0
  %734 = vmatprep.subr.mxu0 0.0
  %735 = vmatpush2.msra.mxu0 0.0
  %736 = vmatprep.mubr.f32.mxu0 0.0
  %737 = vmatmul.mubr.f32.gmra.mxu0 %v668
  %v738 = vpop.f32.mrf.mxu0
  %v739 = vadd.f32 0.0, %v738
  %v740 = vpop.f32.mrf.mxu0
  %741 = vdwg.mxu0
  %742 = vrot.lane.b32.xlu0 %v206, 125
  %v743 = vpop.permute.xlu0 %742
  %v744 = vsel %vm145, %v743, 0
  %746 = vmatprep.subr.mxu0 0.0
  %747 = vmatpush1.msra.mxu0 0.0
  %748 = vmatprep.subr.mxu0 0.0
  %749 = vmatpush1.msra.mxu0 0.0
  %750 = vmatprep.subr.mxu0 0.0
  %751 = vmatpush1.msra.mxu0 0.0
  %752 = vmatprep.subr.mxu0 0.0
  %753 = vmatpush1.msra.mxu0 0.0
  %754 = vmatprep.subr.mxu0 0.0
  %755 = vmatpush1.msra.mxu0 0.0
  %756 = vmatprep.subr.mxu0 0.0
  %757 = vmatpush1.msra.mxu0 0.0
  %758 = vmatprep.subr.mxu0 0.0
  %759 = vmatpush1.msra.mxu0 0.0
  %760 = vmatprep.subr.mxu0 0.0
  %761 = vmatpush1.msra.mxu0 0.0
  %762 = vmatprep.subr.mxu0 0.0
  %763 = vmatpush1.msra.mxu0 0.0
  %764 = vmatprep.subr.mxu0 0.0
  %765 = vmatpush1.msra.mxu0 0.0
  %766 = vmatprep.subr.mxu0 0.0
  %767 = vmatpush1.msra.mxu0 0.0
  %768 = vmatprep.subr.mxu0 0.0
  %769 = vmatpush1.msra.mxu0 0.0
  %770 = vmatprep.subr.mxu0 0.0
  %771 = vmatpush1.msra.mxu0 0.0
  %772 = vmatprep.subr.mxu0 0.0
  %773 = vmatpush1.msra.mxu0 0.0
  %774 = vmatprep.subr.mxu0 0.0
  %775 = vmatpush1.msra.mxu0 0.0
  %776 = vmatprep.subr.mxu0 0.0
  %777 = vmatpush1.msra.mxu0 %v744
  %778 = vmatprep.subr.mxu0 0.0
  %779 = vmatpush2.msra.mxu0 0.0
  %780 = vmatprep.subr.mxu0 0.0
  %781 = vmatpush2.msra.mxu0 0.0
  %782 = vmatprep.subr.mxu0 0.0
  %783 = vmatpush2.msra.mxu0 0.0
  %784 = vmatprep.subr.mxu0 0.0
  %785 = vmatpush2.msra.mxu0 0.0
  %786 = vmatprep.subr.mxu0 0.0
  %787 = vmatpush2.msra.mxu0 0.0
  %788 = vmatprep.subr.mxu0 0.0
  %789 = vmatpush2.msra.mxu0 0.0
  %790 = vmatprep.subr.mxu0 0.0
  %791 = vmatpush2.msra.mxu0 0.0
  %792 = vmatprep.subr.mxu0 0.0
  %793 = vmatpush2.msra.mxu0 0.0
  %794 = vmatprep.subr.mxu0 0.0
  %795 = vmatpush2.msra.mxu0 0.0
  %796 = vmatprep.subr.mxu0 0.0
  %797 = vmatpush2.msra.mxu0 0.0
  %798 = vmatprep.subr.mxu0 0.0
  %799 = vmatpush2.msra.mxu0 0.0
  %800 = vmatprep.subr.mxu0 0.0
  %801 = vmatpush2.msra.mxu0 0.0
  %802 = vmatprep.subr.mxu0 0.0
  %803 = vmatpush2.msra.mxu0 0.0
  %804 = vmatprep.subr.mxu0 0.0
  %805 = vmatpush2.msra.mxu0 0.0
  %806 = vmatprep.subr.mxu0 0.0
  %807 = vmatpush2.msra.mxu0 0.0
  %808 = vmatprep.subr.mxu0 0.0
  %809 = vmatpush2.msra.mxu0 0.0
  %810 = vmatprep.mubr.f32.mxu0 0.0
  %811 = vmatmul.mubr.f32.gmra.mxu0 %v668
  %v812 = vpop.f32.mrf.mxu0
  %v813 = vadd.f32 0.0, %v812
  %v814 = vpop.f32.mrf.mxu0
  %815 = vdwg.mxu0
  %v816 = vadd.f32 %v663, %v739
  %v817 = vadd.f32 %v664, %v813
  %v818 = vld [vmem:[%s6] sm:$0xf]
  %820 = vset.pattern.permute.xlu0 0
  %821 = vperm.xlu0 %820, %v818
  %v822 = vpop.permute.xlu0 %821
  %v824 = vadd.f32 %v816, %v822
  %v825 = vadd.f32 %v817, %v822
  %vm826 = vcmask 60416
  %v827 = vsel %vm826, %v824, 0.0
  %828 = vadd.xlane.f32.xlu0 %v827
  %v829 = vpop.xlane.xlu0 %828
  %v830 = vsel %vm826, %v825, 0.0
  %831 = vadd.xlane.f32.xlu0 %v830
  %v832 = vpop.xlane.xlu0 %831
  %v833 = vsel %vm145, %v829, 0.0
  %v834 = vsel %vm145, %v832, 0.0
  %v835 = vadd.f32 %v833, %v834
  %v836 = vmul.f32 %v824, %v824
  %v837 = vmul.f32 %v825, %v825
  %v838 = vsel %vm826, %v836, 0.0
  %839 = vadd.xlane.f32.xlu0 %v838
  %v840 = vpop.xlane.xlu0 %839
  %v841 = vsel %vm826, %v837, 0.0
  %842 = vadd.xlane.f32.xlu0 %v841
  %v843 = vpop.xlane.xlu0 %842
  %v844 = vsel %vm145, %v840, 0.0
  %v845 = vsel %vm145, %v843, 0.0
  %v846 = vadd.f32 %v844, %v845
  %v847 = vmul.f32 %v835, 0.0625
  %v848 = vmul.f32 %v846, 0.0625
  %v849 = vmul.f32 %v847, %v847
  %v850 = vsub.f32 %v848, %v849
  %v851 = vmax.f32 %v850, 0.0
  %v852 = vadd.f32 %v851, 1e-05
  %v853 = vrsqrt.pop %v852
  %v854 = vld [vmem:[%s7] sm:$0xf]
  %v855 = vmul.f32 %v853, %v854
  %v856 = vld [vmem:[%s8] sm:$0xf]
  %v857 = vmul.f32 %v847, %v855
  %v858 = vsub.f32 %v856, %v857
  %860 = vset.pattern.permute.xlu0 0
  %861 = vperm.xlu0 %860, %v855
  %v862 = vpop.permute.xlu0 %861
  %v864 = vmul.f32 %v824, %v862
  %v865 = vmul.f32 %v825, %v862
  %867 = vset.pattern.permute.xlu0 0
  %868 = vperm.xlu0 %867, %v858
  %v869 = vpop.permute.xlu0 %868
  %v871 = vadd.f32 %v864, %v869
  %v872 = vadd.f32 %v865, %v869
  %v873 = vmax.f32 %v871, 0.0
  %v874 = vmax.f32 %v872, 0.0
  %875 = vst.msk [vmem:[%s9] sm:$0xf] %vm826, %v873
  %876 = vst.msk [vmem:[%s9 + $0x4] sm:$0xf] %vm826, %v874
  // Predicated region
  $region38: #{dis_conv_label_emb_forward.2} parent=0 // pred_check
    _
  $region39: #{dis_conv_label_emb_forward.2} parent=0 // pred_check_branch
    %878 = sbr.rel (0) target = $region41
  $region40: #{dis_conv_label_emb_forward.2} parent=0 // pred_region
    _
  $region41: #{dis_conv_label_emb_forward.2} parent=0 // pred_fallthru
    _
  // Predicated region
  $region42: #{dis_conv_label_emb_forward.2} parent=0 // pred_check
    _
  $region43: #{dis_conv_label_emb_forward.2} parent=0 // pred_check_branch
    %880 = sbr.rel (0) target = $region45
  $region44: #{dis_conv_label_emb_forward.2} parent=0 // pred_region
    _
  $region45: #{dis_conv_label_emb_forward.2} parent=0 // pred_fallthru
    _

</llo_original>
